<compile_context>
chip_gen: v5e
topology: v5e:2x2
jax: 0.10.0
libtpu: 0.0.40
codegen_flags: <defaults>
</compile_context>

<pallas_src>
import functools

import jax
import jax.numpy as jnp
from jax.experimental import pallas as pl
from jax.experimental.pallas import tpu as pltpu


# ----------------------------- kernel helpers ------------------------------

def _layernorm(x, scale, shift, eps):
    mean = jnp.mean(x, axis=-1, keepdims=True)
    var = jnp.mean((x - mean) ** 2, axis=-1, keepdims=True)   # unbiased=False
    return (x - mean) * jax.lax.rsqrt(var + eps) * scale + shift


def _gelu(x):
    c = jnp.sqrt(jnp.float32(2.0 / jnp.pi))
    return 0.5 * x * (1.0 + jnp.tanh(c * (x + 0.044715 * x * x * x)))


# ----------------------- stacked transformer-layer kernel -------------------
# grid = (B // tb, n_layers).  One grid step == one full transformer block
# over a (tb, S, E) batch tile.  The output block (constant index across the
# layer axis) carries the residual stream in VMEM; it is initialized from the
# input on layer 0 and written back to HBM only when the batch tile changes.

def _stack_kernel(n_heads, head_dim, eps,
                  x_ref,
                  ln1s_ref, ln1b_ref,
                  wqkv_ref, bqkv_ref, wo_ref, bo_ref,
                  ln2s_ref, ln2b_ref,
                  w1_ref, b1_ref, w2_ref, b2_ref,
                  o_ref):
    layer = pl.program_id(1)

    @pl.when(layer == 0)
    def _():
        o_ref[...] = x_ref[...]

    B, S, E = o_ref.shape
    x = o_ref[...]                                     # (tb, S, E) f32 residual

    # --- LayerNorm 1 ---
    xn = _layernorm(x, ln1s_ref[0], ln1b_ref[0], eps)  # (tb, S, E)

    # --- fused QKV projection: one (tb*S, E) @ (E, 3E) matmul ---
    xn2d = xn.reshape(B * S, E).astype(jnp.bfloat16)
    qkv = jnp.dot(xn2d, wqkv_ref[0],
                  preferred_element_type=jnp.float32) + bqkv_ref[0]   # (tb*S, 3E)
    inv_sqrt_d = 1.0 / jnp.sqrt(jnp.float32(head_dim))
    q = ((qkv[:, :E] * inv_sqrt_d)                     # fold scale into q
         .reshape(B, S, E).astype(jnp.bfloat16))
    k = qkv[:, E:2 * E].reshape(B, S, E).astype(jnp.bfloat16)
    v = qkv[:, 2 * E:].reshape(B, S, E).astype(jnp.bfloat16)

    # --- causal mask built in-kernel (no HBM array, no DMA), broadcast once ---
    rows = jax.lax.broadcasted_iota(jnp.int32, (S, S), 0)
    cols = jax.lax.broadcasted_iota(jnp.int32, (S, S), 1)
    neg = jnp.where(cols > rows, jnp.float32(-1e30), jnp.float32(0.0))
    neg_b = jnp.broadcast_to(neg, (B, S, S))           # hoisted out of head loop

    # --- causal attention: heads unrolled, batch dim handled by einsum.
    # Per-head contexts are concatenated in vregs (no masked lane-slice stores).
    ctx_parts = []
    for h in range(n_heads):
        sl = slice(h * head_dim, (h + 1) * head_dim)
        s = jnp.einsum("bqd,bkd->bqk", q[:, :, sl], k[:, :, sl],
                       preferred_element_type=jnp.float32) + neg_b
        s = s - jnp.max(s, axis=-1, keepdims=True)
        e = jnp.exp(s)
        p = e * pl.reciprocal(jnp.sum(e, axis=-1, keepdims=True), approx=True)
        ctx_parts.append(
            jnp.einsum("bqk,bkd->bqd", p.astype(jnp.bfloat16), v[:, :, sl],
                       preferred_element_type=jnp.float32))
    ctx = jnp.concatenate(ctx_parts, axis=-1)          # (tb, S, E) f32

    ctx2d = ctx.reshape(B * S, E).astype(jnp.bfloat16)
    attn = jnp.dot(ctx2d, wo_ref[0],
                   preferred_element_type=jnp.float32) + bo_ref[0]
    x = x + attn.reshape(B, S, E)                      # dropout(p=0.0) == id

    # --- LayerNorm 2 + FeedForward (GELU, tanh approx) ---
    xn2 = _layernorm(x, ln2s_ref[0], ln2b_ref[0], eps)
    xn2d2 = xn2.reshape(B * S, E).astype(jnp.bfloat16)
    h1 = jnp.dot(xn2d2, w1_ref[0],
                 preferred_element_type=jnp.float32) + b1_ref[0]      # (tb*S, 4E)
    h1 = _gelu(h1).astype(jnp.bfloat16)                # GELU kept f32 for accuracy
    h2 = jnp.dot(h1, w2_ref[0],
                 preferred_element_type=jnp.float32) + b2_ref[0]      # (tb*S, E)
    x = x + h2.reshape(B, S, E)

    o_ref[...] = x                                     # residual carry in o_ref


def run_transformer_stack(x, p, n_heads, eps=1e-5, tb=1):
    B, S, E = x.shape
    L = p["wqkv"].shape[0]
    H4 = 4 * E
    head_dim = E // n_heads
    assert B % tb == 0
    nb = B // tb

    kernel = functools.partial(_stack_kernel, n_heads, head_dim, eps)

    def rep(shape):          # per-layer stacked param, layer axis leading
        return pl.BlockSpec(shape,
                            lambda b, l, _s=shape: (l,) + (0,) * (len(_s) - 1))

    in_specs = [
        pl.BlockSpec((tb, S, E), lambda b, l: (b, 0, 0)),   # x (batch tile)
        rep((1, 1, E)), rep((1, 1, E)),                 # ln1 scale/shift
        rep((1, E, 3 * E)), rep((1, 1, 3 * E)),         # wqkv (bf16), bqkv
        rep((1, E, E)), rep((1, 1, E)),                 # wo (bf16), bo
        rep((1, 1, E)), rep((1, 1, E)),                 # ln2 scale/shift
        rep((1, E, H4)), rep((1, 1, H4)),               # w1 (bf16), b1
        rep((1, H4, E)), rep((1, 1, E)),                # w2 (bf16), b2
    ]
    return pl.pallas_call(
        kernel,
        out_shape=jax.ShapeDtypeStruct((B, S, E), jnp.float32),
        grid=(nb, L),
        in_specs=in_specs,
        out_specs=pl.BlockSpec((tb, S, E), lambda b, l: (b, 0, 0)),
        compiler_params=pltpu.CompilerParams(
            dimension_semantics=("parallel", "arbitrary"),
            vmem_limit_bytes=64 * 1024 * 1024),
    )(x,
      p["ln1_s"], p["ln1_b"],
      p["wqkv"], p["bqkv"],
      p["wo"], p["bo"],
      p["ln2_s"], p["ln2_b"],
      p["w1"], p["b1"],
      p["w2"], p["b2"])


# ------------------------- final LayerNorm + LM head ------------------------
# Tiled over (rows, vocab): both axes "parallel" (megacore on v7x), vocab tile
# is a multiple of 128 (lane-dense unmasked stores), weight slabs streamed.

def _head_kernel(eps, x_ref, s_ref, b_ref, w_ref, bias_ref, o_ref):
    xn = _layernorm(x_ref[...], s_ref[...], b_ref[...], eps)
    o_ref[...] = jnp.dot(xn.astype(jnp.bfloat16), w_ref[...],
                         preferred_element_type=jnp.float32) + bias_ref[...]


def run_final_head(x2d, scale, shift, w, b, eps=1e-5):
    N, E = x2d.shape
    V = w.shape[1]
    tm = N if N <= 256 else 256
    tv = V if V <= 512 else 512
    assert N % tm == 0 and V % tv == 0
    return pl.pallas_call(
        functools.partial(_head_kernel, eps),
        out_shape=jax.ShapeDtypeStruct((N, V), jnp.float32),
        grid=(N // tm, V // tv),
        in_specs=[
            pl.BlockSpec((tm, E), lambda i, j: (i, 0)),
            pl.BlockSpec((1, E), lambda i, j: (0, 0)),
            pl.BlockSpec((1, E), lambda i, j: (0, 0)),
            pl.BlockSpec((E, tv), lambda i, j: (0, j)),
            pl.BlockSpec((1, tv), lambda i, j: (0, j)),
        ],
        out_specs=pl.BlockSpec((tm, tv), lambda i, j: (i, j)),
        compiler_params=pltpu.CompilerParams(
            dimension_semantics=("parallel", "parallel"),
            vmem_limit_bytes=64 * 1024 * 1024),
    )(x2d, scale, shift, w, b)


# ------------------------------- full model --------------------------------

def model_forward(ids, params, cfg):
    B, S = ids.shape
    E = cfg["emb_dim"]
    # Embedding gather + positional add is glue (data-dependent gather in JAX).
    # TODO(synk): embedding gather stays in plain JAX (no clean tiled Pallas win here).
    x = params["tok_emb"][ids] + params["pos_emb"][:S]      # (B, S, E)
    # dropout(p=0.0) == identity
    x = run_transformer_stack(x, params, cfg["n_heads"])
    logits = run_final_head(x.reshape(B * S, E),
                            params["norm_s"], params["norm_b"],
                            params["w_out"], params["b_out"])
    return logits.reshape(B, S, cfg["vocab_size"])


def init_params(key, cfg):
    V, C, E, L = (cfg["vocab_size"], cfg["context_length"],
                  cfg["emb_dim"], cfg["n_layers"])
    H4 = 4 * E
    bf16 = jnp.bfloat16

    def nrm(k, shape, s=0.02):
        return (s * jax.random.normal(k, shape)).astype(jnp.float32)

    keys = jax.random.split(key, 4 + L)
    params = {
        "tok_emb": nrm(keys[0], (V, E)),
        "pos_emb": nrm(keys[1], (C, E)),
        "norm_s": jnp.ones((1, E), jnp.float32),
        "norm_b": jnp.zeros((1, E), jnp.float32),
        # Matmul weights pre-cast to bf16 ONCE here (no per-forward cast op).
        "w_out": nrm(keys[2], (E, V)).astype(bf16),
        "b_out": nrm(keys[3], (1, V)),
    }

    wqkv, bqkv, wo, bo, w1, b1, w2, b2 = ([] for _ in range(8))
    ln1s, ln1b, ln2s, ln2b = ([] for _ in range(4))
    for li in range(L):
        ks = jax.random.split(keys[4 + li], 12)
        wqkv.append(jnp.concatenate(
            [nrm(ks[0], (E, E)), nrm(ks[2], (E, E)), nrm(ks[4], (E, E))], axis=1))
        bqkv.append(jnp.concatenate(
            [nrm(ks[1], (1, E)), nrm(ks[3], (1, E)), nrm(ks[5], (1, E))], axis=1))
        wo.append(nrm(ks[6], (E, E))); bo.append(nrm(ks[7], (1, E)))
        w1.append(nrm(ks[8], (E, H4))); b1.append(nrm(ks[9], (1, H4)))
        w2.append(nrm(ks[10], (H4, E))); b2.append(nrm(ks[11], (1, E)))
        ln1s.append(jnp.ones((1, E), jnp.float32))
        ln1b.append(jnp.zeros((1, E), jnp.float32))
        ln2s.append(jnp.ones((1, E), jnp.float32))
        ln2b.append(jnp.zeros((1, E), jnp.float32))

    stack = lambda xs: jnp.stack(xs, axis=0)
    params.update(
        wqkv=stack(wqkv).astype(bf16), bqkv=stack(bqkv),
        wo=stack(wo).astype(bf16), bo=stack(bo),
        w1=stack(w1).astype(bf16), b1=stack(b1),
        w2=stack(w2).astype(bf16), b2=stack(b2),
        ln1_s=stack(ln1s), ln1_b=stack(ln1b),
        ln2_s=stack(ln2s), ln2_b=stack(ln2b))
    return params


# --------------------------- pure-JAX reference -----------------------------

def _ref_ln(x, s, b, eps=1e-5):
    m = x.mean(-1, keepdims=True)
    v = ((x - m) ** 2).mean(-1, keepdims=True)
    return (x - m) / jnp.sqrt(v + eps) * s + b


def _ref_gelu(x):
    return 0.5 * x * (1 + jnp.tanh(jnp.sqrt(2.0 / jnp.pi) * (x + 0.044715 * x ** 3)))


def ref_forward(ids, params, cfg):
    B, S = ids.shape
    E, H, L = cfg["emb_dim"], cfg["n_heads"], cfg["n_layers"]
    D = E // H
    hi = jax.lax.Precision.HIGHEST
    f32 = jnp.float32
    x = params["tok_emb"][ids] + params["pos_emb"][:S]
    mask = jnp.triu(jnp.ones((S, S), bool), 1)
    for l in range(L):
        wq = params["wqkv"][l][:, :E].astype(f32)
        wk = params["wqkv"][l][:, E:2 * E].astype(f32)
        wv = params["wqkv"][l][:, 2 * E:].astype(f32)
        bq = params["bqkv"][l][:, :E]
        bk = params["bqkv"][l][:, E:2 * E]
        bv = params["bqkv"][l][:, 2 * E:]
        xn = _ref_ln(x, params["ln1_s"][l], params["ln1_b"][l])
        q = jnp.einsum("bse,ef->bsf", xn, wq, precision=hi) + bq
        k = jnp.einsum("bse,ef->bsf", xn, wk, precision=hi) + bk
        v = jnp.einsum("bse,ef->bsf", xn, wv, precision=hi) + bv
        q = q.reshape(B, S, H, D); k = k.reshape(B, S, H, D); v = v.reshape(B, S, H, D)
        s = jnp.einsum("bqhd,bkhd->bhqk", q, k, precision=hi) / jnp.sqrt(f32(D))
        s = jnp.where(mask, -1e30, s)
        w = jax.nn.softmax(s, axis=-1)
        ctx = jnp.einsum("bhqk,bkhd->bqhd", w, v, precision=hi).reshape(B, S, E)
        x = x + jnp.einsum("bse,ef->bsf", ctx, params["wo"][l].astype(f32),
                           precision=hi) + params["bo"][l]
        xn2 = _ref_ln(x, params["ln2_s"][l], params["ln2_b"][l])
        h1 = _ref_gelu(jnp.einsum("bse,ef->bsf", xn2, params["w1"][l].astype(f32),
                                  precision=hi) + params["b1"][l])
        x = x + jnp.einsum("bsf,fe->bse", h1, params["w2"][l].astype(f32),
                           precision=hi) + params["b2"][l]
    xn = _ref_ln(x, params["norm_s"], params["norm_b"])
    return jnp.einsum("bse,ev->bsv", xn, params["w_out"].astype(f32),
                      precision=hi) + params["b_out"]


# ----------------------------------- main -----------------------------------

if __name__ == "__main__":
    cfg = dict(vocab_size=128, context_length=16, emb_dim=32,
               n_heads=4, n_layers=2, dropout=0.0, qkv_bias=True)

    key = jax.random.PRNGKey(0)
    k_params, k_ids = jax.random.split(key)
    params = init_params(k_params, cfg)

    batch, seq = 2, 8
    ids = jax.random.randint(k_ids, (batch, seq), 0, cfg["vocab_size"], dtype=jnp.int32)

    logits = model_forward(ids, params, cfg)
    logits = jax.block_until_ready(logits)
    assert logits.shape == (batch, seq, cfg["vocab_size"])

    ref = ref_forward(ids, params, cfg)
    assert jnp.allclose(logits, ref, atol=2e-2, rtol=2e-2), (
        float(jnp.max(jnp.abs(logits - ref))))

    print("KERNEL_OK")
</pallas_src>

<mosaic_0001>
module attributes {stable_mosaic.version = 11 : i64} {
  func.func @_stack_kernel(%arg0: i32, %arg1: i32, %arg2: memref<1x8x32xf32, #tpu.memory_space<vmem>>, %arg3: memref<1x1x32xf32, #tpu.memory_space<vmem>>, %arg4: memref<1x1x32xf32, #tpu.memory_space<vmem>>, %arg5: memref<1x32x96xbf16, #tpu.memory_space<vmem>>, %arg6: memref<1x1x96xf32, #tpu.memory_space<vmem>>, %arg7: memref<1x32x32xbf16, #tpu.memory_space<vmem>>, %arg8: memref<1x1x32xf32, #tpu.memory_space<vmem>>, %arg9: memref<1x1x32xf32, #tpu.memory_space<vmem>>, %arg10: memref<1x1x32xf32, #tpu.memory_space<vmem>>, %arg11: memref<1x32x128xbf16, #tpu.memory_space<vmem>>, %arg12: memref<1x1x128xf32, #tpu.memory_space<vmem>>, %arg13: memref<1x128x32xbf16, #tpu.memory_space<vmem>>, %arg14: memref<1x1x32xf32, #tpu.memory_space<vmem>>, %arg15: memref<1x8x32xf32, #tpu.memory_space<vmem>>) attributes {dimension_semantics = [#tpu.dimension_semantics<parallel>, #tpu.dimension_semantics<arbitrary>], iteration_bounds = array<i64: 2, 2>, scalar_prefetch = 0 : i64, scratch_operands = 0 : i64, tpu.core_type = #tpu.core_type<tc>, window_params = [{transform_indices = @transform_0, window_bounds = array<i64: 1, 8, 32>}, {transform_indices = @transform_1, window_bounds = array<i64: 1, 1, 32>}, {transform_indices = @transform_2, window_bounds = array<i64: 1, 1, 32>}, {transform_indices = @transform_3, window_bounds = array<i64: 1, 32, 96>}, {transform_indices = @transform_4, window_bounds = array<i64: 1, 1, 96>}, {transform_indices = @transform_5, window_bounds = array<i64: 1, 32, 32>}, {transform_indices = @transform_6, window_bounds = array<i64: 1, 1, 32>}, {transform_indices = @transform_7, window_bounds = array<i64: 1, 1, 32>}, {transform_indices = @transform_8, window_bounds = array<i64: 1, 1, 32>}, {transform_indices = @transform_9, window_bounds = array<i64: 1, 32, 128>}, {transform_indices = @transform_10, window_bounds = array<i64: 1, 1, 128>}, {transform_indices = @transform_11, window_bounds = array<i64: 1, 128, 32>}, {transform_indices = @transform_12, window_bounds = array<i64: 1, 1, 32>}, {transform_indices = @transform_13, window_bounds = array<i64: 1, 8, 32>}]} {
    %c0_i32 = arith.constant 0 : i32
    %0 = arith.cmpi eq, %arg1, %c0_i32 : i32
    %1 = arith.extui %0 : i1 to i32
    %c0_i32_0 = arith.constant 0 : i32
    %2 = arith.cmpi ne, %1, %c0_i32_0 : i32
    scf.if %2 {
      %c0_79 = arith.constant 0 : index
      %c0_80 = arith.constant 0 : index
      %c0_81 = arith.constant 0 : index
      %203 = vector.load %arg2[%c0_79, %c0_80, %c0_81] : memref<1x8x32xf32, #tpu.memory_space<vmem>>, vector<1x8x32xf32>
      %c0_82 = arith.constant 0 : index
      %c0_83 = arith.constant 0 : index
      %c0_84 = arith.constant 0 : index
      %204 = vector.load %arg15[%c0_82, %c0_83, %c0_84] : memref<1x8x32xf32, #tpu.memory_space<vmem>>, vector<1x8x32xf32>
      tpu.vector_store %arg15[%c0_82, %c0_83, %c0_84], %203 {strides = array<i32>} : memref<1x8x32xf32, #tpu.memory_space<vmem>>, vector<1x8x32xf32>,
    } else {
    }
    %c0 = arith.constant 0 : index
    %c0_1 = arith.constant 0 : index
    %c0_2 = arith.constant 0 : index
    %3 = vector.load %arg15[%c0, %c0_1, %c0_2] : memref<1x8x32xf32, #tpu.memory_space<vmem>>, vector<1x8x32xf32>
    %c0_3 = arith.constant 0 : index
    %c0_4 = arith.constant 0 : index
    %c0_5 = arith.constant 0 : index
    %4 = vector.load %arg3[%c0_3, %c0_4, %c0_5] : memref<1x1x32xf32, #tpu.memory_space<vmem>>, vector<1x1x32xf32>
    %5 = vector.shape_cast %4 : vector<1x1x32xf32> to vector<1x32xf32>
    %c0_6 = arith.constant 0 : index
    %c0_7 = arith.constant 0 : index
    %c0_8 = arith.constant 0 : index
    %6 = vector.load %arg4[%c0_6, %c0_7, %c0_8] : memref<1x1x32xf32, #tpu.memory_space<vmem>>, vector<1x1x32xf32>
    %7 = vector.shape_cast %6 : vector<1x1x32xf32> to vector<1x32xf32>
    %cst = arith.constant dense<0.000000e+00> : vector<1x8xf32>
    %8 = vector.multi_reduction <add>, %3, %cst [2] : vector<1x8x32xf32> to vector<1x8xf32>
    %9 = vector.shape_cast %8 : vector<1x8xf32> to vector<1x8x1xf32>
    %cst_9 = arith.constant 3.200000e+01 : f32
    %10 = vector.broadcast %cst_9 : f32 to vector<1x8x1xf32>
    %11 = arith.divf %9, %10 : vector<1x8x1xf32>
    %12 = vector.broadcast %11 : vector<1x8x1xf32> to vector<1x8x32xf32>
    %13 = arith.subf %3, %12 : vector<1x8x32xf32>
    %14 = arith.mulf %13, %13 : vector<1x8x32xf32>
    %cst_10 = arith.constant dense<0.000000e+00> : vector<1x8xf32>
    %15 = vector.multi_reduction <add>, %14, %cst_10 [2] : vector<1x8x32xf32> to vector<1x8xf32>
    %16 = vector.shape_cast %15 : vector<1x8xf32> to vector<1x8x1xf32>
    %cst_11 = arith.constant 3.200000e+01 : f32
    %17 = vector.broadcast %cst_11 : f32 to vector<1x8x1xf32>
    %18 = arith.divf %16, %17 : vector<1x8x1xf32>
    %19 = vector.broadcast %11 : vector<1x8x1xf32> to vector<1x8x32xf32>
    %20 = arith.subf %3, %19 : vector<1x8x32xf32>
    %cst_12 = arith.constant 9.99999974E-6 : f32
    %21 = vector.broadcast %cst_12 : f32 to vector<1x8x1xf32>
    %22 = arith.addf %18, %21 : vector<1x8x1xf32>
    %23 = math.rsqrt %22 : vector<1x8x1xf32>
    %24 = vector.broadcast %23 : vector<1x8x1xf32> to vector<1x8x32xf32>
    %25 = arith.mulf %20, %24 : vector<1x8x32xf32>
    %26 = vector.shape_cast %5 : vector<1x32xf32> to vector<1x1x32xf32>
    %27 = vector.broadcast %26 : vector<1x1x32xf32> to vector<1x8x32xf32>
    %28 = arith.mulf %25, %27 : vector<1x8x32xf32>
    %29 = vector.shape_cast %7 : vector<1x32xf32> to vector<1x1x32xf32>
    %30 = vector.broadcast %29 : vector<1x1x32xf32> to vector<1x8x32xf32>
    %31 = arith.addf %28, %30 : vector<1x8x32xf32>
    %32 = vector.shape_cast %31 : vector<1x8x32xf32> to vector<8x32xf32>
    %33 = arith.truncf %32 : vector<8x32xf32> to vector<8x32xbf16>
    %c0_13 = arith.constant 0 : index
    %c0_14 = arith.constant 0 : index
    %c0_15 = arith.constant 0 : index
    %34 = vector.load %arg5[%c0_13, %c0_14, %c0_15] : memref<1x32x96xbf16, #tpu.memory_space<vmem>>, vector<1x32x96xbf16>
    %35 = vector.shape_cast %34 : vector<1x32x96xbf16> to vector<32x96xbf16>
    %cst_16 = arith.constant dense<0.000000e+00> : vector<8x96xf32>
    %36 = tpu.matmul %33, %35, %cst_16 {dimension_numbers = #tpu.dot_dimension_numbers<[1], [0], [0], [1], [0, 0, 1, 1], [], []>} : vector<8x32xbf16>, vector<32x96xbf16>, vector<8x96xf32> -> vector<8x96xf32>
    %c0_17 = arith.constant 0 : index
    %c0_18 = arith.constant 0 : index
    %c0_19 = arith.constant 0 : index
    %37 = vector.load %arg6[%c0_17, %c0_18, %c0_19] : memref<1x1x96xf32, #tpu.memory_space<vmem>>, vector<1x1x96xf32>
    %38 = vector.shape_cast %37 : vector<1x1x96xf32> to vector<1x96xf32>
    %39 = vector.broadcast %38 : vector<1x96xf32> to vector<8x96xf32>
    %40 = arith.addf %36, %39 : vector<8x96xf32>
    %cst_20 = arith.constant 8.000000e+00 : f32
    %41 = math.sqrt %cst_20 : f32
    %cst_21 = arith.constant 1.000000e+00 : f32
    %42 = arith.divf %cst_21, %41 : f32
    %43 = vector.extract_strided_slice %40 {offsets = [0, 0], sizes = [8, 32], strides = [1, 1]} : vector<8x96xf32> to vector<8x32xf32>
    %44 = vector.broadcast %42 : f32 to vector<8x32xf32>
    %45 = arith.mulf %43, %44 : vector<8x32xf32>
    %46 = vector.shape_cast %45 : vector<8x32xf32> to vector<1x8x32xf32>
    %47 = arith.truncf %46 : vector<1x8x32xf32> to vector<1x8x32xbf16>
    %48 = vector.extract_strided_slice %40 {offsets = [0, 32], sizes = [8, 32], strides = [1, 1]} : vector<8x96xf32> to vector<8x32xf32>
    %49 = vector.shape_cast %48 : vector<8x32xf32> to vector<1x8x32xf32>
    %50 = arith.truncf %49 : vector<1x8x32xf32> to vector<1x8x32xbf16>
    %51 = vector.extract_strided_slice %40 {offsets = [0, 64], sizes = [8, 32], strides = [1, 1]} : vector<8x96xf32> to vector<8x32xf32>
    %52 = vector.shape_cast %51 : vector<8x32xf32> to vector<1x8x32xf32>
    %53 = arith.truncf %52 : vector<1x8x32xf32> to vector<1x8x32xbf16>
    %54 = tpu.iota {dimensions = array<i32: 0>} : vector<8x8xi32>
    %55 = tpu.iota {dimensions = array<i32: 1>} : vector<8x8xi32>
    %56 = arith.cmpi sgt, %55, %54 : vector<8x8xi32>
    %cst_22 = arith.constant -1.000000e+30 : f32
    %cst_23 = arith.constant 0.000000e+00 : f32
    %57 = vector.broadcast %cst_22 : f32 to vector<8x8xf32>
    %58 = vector.broadcast %cst_23 : f32 to vector<8x8xf32>
    %59 = arith.select %56, %57, %58 : vector<8x8xi1>, vector<8x8xf32>
    %60 = vector.shape_cast %59 : vector<8x8xf32> to vector<1x8x8xf32>
    %61 = vector.extract_strided_slice %47 {offsets = [0, 0, 0], sizes = [1, 8, 8], strides = [1, 1, 1]} : vector<1x8x32xbf16> to vector<1x8x8xbf16>
    %62 = vector.extract_strided_slice %50 {offsets = [0, 0, 0], sizes = [1, 8, 8], strides = [1, 1, 1]} : vector<1x8x32xbf16> to vector<1x8x8xbf16>
    "tpu.trace_start"() <{level = 10 : i32, message = "bqd,bkd->bqk"}> : () -> ()
    %cst_24 = arith.constant dense<0.000000e+00> : vector<1x8x8xf32>
    %63 = tpu.matmul %61, %62, %cst_24 {dimension_numbers = #tpu.dot_dimension_numbers<[2], [2], [1], [1], [0, 0, 0, 1, 1, 1], [0], [0]>} : vector<1x8x8xbf16>, vector<1x8x8xbf16>, vector<1x8x8xf32> -> vector<1x8x8xf32>
    "tpu.trace_stop"() : () -> ()
    %64 = arith.addf %63, %60 : vector<1x8x8xf32>
    %cst_25 = arith.constant dense<0xFF800000> : vector<1x8xf32>
    %65 = vector.multi_reduction <maximumf>, %64, %cst_25 [2] : vector<1x8x8xf32> to vector<1x8xf32>
    %66 = vector.shape_cast %65 : vector<1x8xf32> to vector<1x8x1xf32>
    %67 = vector.broadcast %66 : vector<1x8x1xf32> to vector<1x8x8xf32>
    %68 = arith.subf %64, %67 : vector<1x8x8xf32>
    %69 = math.exp %68 : vector<1x8x8xf32>
    %cst_26 = arith.constant dense<0.000000e+00> : vector<1x8xf32>
    %70 = vector.multi_reduction <add>, %69, %cst_26 [2] : vector<1x8x8xf32> to vector<1x8xf32>
    %71 = vector.shape_cast %70 : vector<1x8xf32> to vector<1x8x1xf32>
    %72 = tpu.reciprocal %71 {approx = true} : vector<1x8x1xf32> -> vector<1x8x1xf32>
    %73 = vector.broadcast %72 : vector<1x8x1xf32> to vector<1x8x8xf32>
    %74 = arith.mulf %69, %73 : vector<1x8x8xf32>
    %75 = arith.truncf %74 : vector<1x8x8xf32> to vector<1x8x8xbf16>
    %76 = vector.extract_strided_slice %53 {offsets = [0, 0, 0], sizes = [1, 8, 8], strides = [1, 1, 1]} : vector<1x8x32xbf16> to vector<1x8x8xbf16>
    "tpu.trace_start"() <{level = 10 : i32, message = "bqk,bkd->bqd"}> : () -> ()
    %cst_27 = arith.constant dense<0.000000e+00> : vector<1x8x8xf32>
    %77 = tpu.matmul %75, %76, %cst_27 {dimension_numbers = #tpu.dot_dimension_numbers<[2], [1], [1], [2], [0, 0, 0, 1, 1, 2], [0], [0]>} : vector<1x8x8xbf16>, vector<1x8x8xbf16>, vector<1x8x8xf32> -> vector<1x8x8xf32>
    "tpu.trace_stop"() : () -> ()
    %78 = vector.extract_strided_slice %47 {offsets = [0, 0, 8], sizes = [1, 8, 8], strides = [1, 1, 1]} : vector<1x8x32xbf16> to vector<1x8x8xbf16>
    %79 = vector.extract_strided_slice %50 {offsets = [0, 0, 8], sizes = [1, 8, 8], strides = [1, 1, 1]} : vector<1x8x32xbf16> to vector<1x8x8xbf16>
    "tpu.trace_start"() <{level = 10 : i32, message = "bqd,bkd->bqk"}> : () -> ()
    %cst_28 = arith.constant dense<0.000000e+00> : vector<1x8x8xf32>
    %80 = tpu.matmul %78, %79, %cst_28 {dimension_numbers = #tpu.dot_dimension_numbers<[2], [2], [1], [1], [0, 0, 0, 1, 1, 1], [0], [0]>} : vector<1x8x8xbf16>, vector<1x8x8xbf16>, vector<1x8x8xf32> -> vector<1x8x8xf32>
    "tpu.trace_stop"() : () -> ()
    %81 = arith.addf %80, %60 : vector<1x8x8xf32>
    %cst_29 = arith.constant dense<0xFF800000> : vector<1x8xf32>
    %82 = vector.multi_reduction <maximumf>, %81, %cst_29 [2] : vector<1x8x8xf32> to vector<1x8xf32>
    %83 = vector.shape_cast %82 : vector<1x8xf32> to vector<1x8x1xf32>
    %84 = vector.broadcast %83 : vector<1x8x1xf32> to vector<1x8x8xf32>
    %85 = arith.subf %81, %84 : vector<1x8x8xf32>
    %86 = math.exp %85 : vector<1x8x8xf32>
    %cst_30 = arith.constant dense<0.000000e+00> : vector<1x8xf32>
    %87 = vector.multi_reduction <add>, %86, %cst_30 [2] : vector<1x8x8xf32> to vector<1x8xf32>
    %88 = vector.shape_cast %87 : vector<1x8xf32> to vector<1x8x1xf32>
    %89 = tpu.reciprocal %88 {approx = true} : vector<1x8x1xf32> -> vector<1x8x1xf32>
    %90 = vector.broadcast %89 : vector<1x8x1xf32> to vector<1x8x8xf32>
    %91 = arith.mulf %86, %90 : vector<1x8x8xf32>
    %92 = arith.truncf %91 : vector<1x8x8xf32> to vector<1x8x8xbf16>
    %93 = vector.extract_strided_slice %53 {offsets = [0, 0, 8], sizes = [1, 8, 8], strides = [1, 1, 1]} : vector<1x8x32xbf16> to vector<1x8x8xbf16>
    "tpu.trace_start"() <{level = 10 : i32, message = "bqk,bkd->bqd"}> : () -> ()
    %cst_31 = arith.constant dense<0.000000e+00> : vector<1x8x8xf32>
    %94 = tpu.matmul %92, %93, %cst_31 {dimension_numbers = #tpu.dot_dimension_numbers<[2], [1], [1], [2], [0, 0, 0, 1, 1, 2], [0], [0]>} : vector<1x8x8xbf16>, vector<1x8x8xbf16>, vector<1x8x8xf32> -> vector<1x8x8xf32>
    "tpu.trace_stop"() : () -> ()
    %95 = vector.extract_strided_slice %47 {offsets = [0, 0, 16], sizes = [1, 8, 8], strides = [1, 1, 1]} : vector<1x8x32xbf16> to vector<1x8x8xbf16>
    %96 = vector.extract_strided_slice %50 {offsets = [0, 0, 16], sizes = [1, 8, 8], strides = [1, 1, 1]} : vector<1x8x32xbf16> to vector<1x8x8xbf16>
    "tpu.trace_start"() <{level = 10 : i32, message = "bqd,bkd->bqk"}> : () -> ()
    %cst_32 = arith.constant dense<0.000000e+00> : vector<1x8x8xf32>
    %97 = tpu.matmul %95, %96, %cst_32 {dimension_numbers = #tpu.dot_dimension_numbers<[2], [2], [1], [1], [0, 0, 0, 1, 1, 1], [0], [0]>} : vector<1x8x8xbf16>, vector<1x8x8xbf16>, vector<1x8x8xf32> -> vector<1x8x8xf32>
    "tpu.trace_stop"() : () -> ()
    %98 = arith.addf %97, %60 : vector<1x8x8xf32>
    %cst_33 = arith.constant dense<0xFF800000> : vector<1x8xf32>
    %99 = vector.multi_reduction <maximumf>, %98, %cst_33 [2] : vector<1x8x8xf32> to vector<1x8xf32>
    %100 = vector.shape_cast %99 : vector<1x8xf32> to vector<1x8x1xf32>
    %101 = vector.broadcast %100 : vector<1x8x1xf32> to vector<1x8x8xf32>
    %102 = arith.subf %98, %101 : vector<1x8x8xf32>
    %103 = math.exp %102 : vector<1x8x8xf32>
    %cst_34 = arith.constant dense<0.000000e+00> : vector<1x8xf32>
    %104 = vector.multi_reduction <add>, %103, %cst_34 [2] : vector<1x8x8xf32> to vector<1x8xf32>
    %105 = vector.shape_cast %104 : vector<1x8xf32> to vector<1x8x1xf32>
    %106 = tpu.reciprocal %105 {approx = true} : vector<1x8x1xf32> -> vector<1x8x1xf32>
    %107 = vector.broadcast %106 : vector<1x8x1xf32> to vector<1x8x8xf32>
    %108 = arith.mulf %103, %107 : vector<1x8x8xf32>
    %109 = arith.truncf %108 : vector<1x8x8xf32> to vector<1x8x8xbf16>
    %110 = vector.extract_strided_slice %53 {offsets = [0, 0, 16], sizes = [1, 8, 8], strides = [1, 1, 1]} : vector<1x8x32xbf16> to vector<1x8x8xbf16>
    "tpu.trace_start"() <{level = 10 : i32, message = "bqk,bkd->bqd"}> : () -> ()
    %cst_35 = arith.constant dense<0.000000e+00> : vector<1x8x8xf32>
    %111 = tpu.matmul %109, %110, %cst_35 {dimension_numbers = #tpu.dot_dimension_numbers<[2], [1], [1], [2], [0, 0, 0, 1, 1, 2], [0], [0]>} : vector<1x8x8xbf16>, vector<1x8x8xbf16>, vector<1x8x8xf32> -> vector<1x8x8xf32>
    "tpu.trace_stop"() : () -> ()
    %112 = vector.extract_strided_slice %47 {offsets = [0, 0, 24], sizes = [1, 8, 8], strides = [1, 1, 1]} : vector<1x8x32xbf16> to vector<1x8x8xbf16>
    %113 = vector.extract_strided_slice %50 {offsets = [0, 0, 24], sizes = [1, 8, 8], strides = [1, 1, 1]} : vector<1x8x32xbf16> to vector<1x8x8xbf16>
    "tpu.trace_start"() <{level = 10 : i32, message = "bqd,bkd->bqk"}> : () -> ()
    %cst_36 = arith.constant dense<0.000000e+00> : vector<1x8x8xf32>
    %114 = tpu.matmul %112, %113, %cst_36 {dimension_numbers = #tpu.dot_dimension_numbers<[2], [2], [1], [1], [0, 0, 0, 1, 1, 1], [0], [0]>} : vector<1x8x8xbf16>, vector<1x8x8xbf16>, vector<1x8x8xf32> -> vector<1x8x8xf32>
    "tpu.trace_stop"() : () -> ()
    %115 = arith.addf %114, %60 : vector<1x8x8xf32>
    %cst_37 = arith.constant dense<0xFF800000> : vector<1x8xf32>
    %116 = vector.multi_reduction <maximumf>, %115, %cst_37 [2] : vector<1x8x8xf32> to vector<1x8xf32>
    %117 = vector.shape_cast %116 : vector<1x8xf32> to vector<1x8x1xf32>
    %118 = vector.broadcast %117 : vector<1x8x1xf32> to vector<1x8x8xf32>
    %119 = arith.subf %115, %118 : vector<1x8x8xf32>
    %120 = math.exp %119 : vector<1x8x8xf32>
    %cst_38 = arith.constant dense<0.000000e+00> : vector<1x8xf32>
    %121 = vector.multi_reduction <add>, %120, %cst_38 [2] : vector<1x8x8xf32> to vector<1x8xf32>
    %122 = vector.shape_cast %121 : vector<1x8xf32> to vector<1x8x1xf32>
    %123 = tpu.reciprocal %122 {approx = true} : vector<1x8x1xf32> -> vector<1x8x1xf32>
    %124 = vector.broadcast %123 : vector<1x8x1xf32> to vector<1x8x8xf32>
    %125 = arith.mulf %120, %124 : vector<1x8x8xf32>
    %126 = arith.truncf %125 : vector<1x8x8xf32> to vector<1x8x8xbf16>
    %127 = vector.extract_strided_slice %53 {offsets = [0, 0, 24], sizes = [1, 8, 8], strides = [1, 1, 1]} : vector<1x8x32xbf16> to vector<1x8x8xbf16>
    "tpu.trace_start"() <{level = 10 : i32, message = "bqk,bkd->bqd"}> : () -> ()
    %cst_39 = arith.constant dense<0.000000e+00> : vector<1x8x8xf32>
    %128 = tpu.matmul %126, %127, %cst_39 {dimension_numbers = #tpu.dot_dimension_numbers<[2], [1], [1], [2], [0, 0, 0, 1, 1, 2], [0], [0]>} : vector<1x8x8xbf16>, vector<1x8x8xbf16>, vector<1x8x8xf32> -> vector<1x8x8xf32>
    "tpu.trace_stop"() : () -> ()
    %129 = tpu.concatenate %77, %94, %111, %128 in 2 : vector<1x8x8xf32>, vector<1x8x8xf32>, vector<1x8x8xf32>, vector<1x8x8xf32> -> vector<1x8x32xf32>
    %130 = vector.shape_cast %129 : vector<1x8x32xf32> to vector<8x32xf32>
    %131 = arith.truncf %130 : vector<8x32xf32> to vector<8x32xbf16>
    %c0_40 = arith.constant 0 : index
    %c0_41 = arith.constant 0 : index
    %c0_42 = arith.constant 0 : index
    %132 = vector.load %arg7[%c0_40, %c0_41, %c0_42] : memref<1x32x32xbf16, #tpu.memory_space<vmem>>, vector<1x32x32xbf16>
    %133 = vector.shape_cast %132 : vector<1x32x32xbf16> to vector<32x32xbf16>
    %cst_43 = arith.constant dense<0.000000e+00> : vector<8x32xf32>
    %134 = tpu.matmul %131, %133, %cst_43 {dimension_numbers = #tpu.dot_dimension_numbers<[1], [0], [0], [1], [0, 0, 1, 1], [], []>} : vector<8x32xbf16>, vector<32x32xbf16>, vector<8x32xf32> -> vector<8x32xf32>
    %c0_44 = arith.constant 0 : index
    %c0_45 = arith.constant 0 : index
    %c0_46 = arith.constant 0 : index
    %135 = vector.load %arg8[%c0_44, %c0_45, %c0_46] : memref<1x1x32xf32, #tpu.memory_space<vmem>>, vector<1x1x32xf32>
    %136 = vector.shape_cast %135 : vector<1x1x32xf32> to vector<1x32xf32>
    %137 = vector.broadcast %136 : vector<1x32xf32> to vector<8x32xf32>
    %138 = arith.addf %134, %137 : vector<8x32xf32>
    %139 = vector.shape_cast %138 : vector<8x32xf32> to vector<1x8x32xf32>
    %140 = arith.addf %3, %139 : vector<1x8x32xf32>
    %c0_47 = arith.constant 0 : index
    %c0_48 = arith.constant 0 : index
    %c0_49 = arith.constant 0 : index
    %141 = vector.load %arg9[%c0_47, %c0_48, %c0_49] : memref<1x1x32xf32, #tpu.memory_space<vmem>>, vector<1x1x32xf32>
    %142 = vector.shape_cast %141 : vector<1x1x32xf32> to vector<1x32xf32>
    %c0_50 = arith.constant 0 : index
    %c0_51 = arith.constant 0 : index
    %c0_52 = arith.constant 0 : index
    %143 = vector.load %arg10[%c0_50, %c0_51, %c0_52] : memref<1x1x32xf32, #tpu.memory_space<vmem>>, vector<1x1x32xf32>
    %144 = vector.shape_cast %143 : vector<1x1x32xf32> to vector<1x32xf32>
    %cst_53 = arith.constant dense<0.000000e+00> : vector<1x8xf32>
    %145 = vector.multi_reduction <add>, %140, %cst_53 [2] : vector<1x8x32xf32> to vector<1x8xf32>
    %146 = vector.shape_cast %145 : vector<1x8xf32> to vector<1x8x1xf32>
    %cst_54 = arith.constant 3.200000e+01 : f32
    %147 = vector.broadcast %cst_54 : f32 to vector<1x8x1xf32>
    %148 = arith.divf %146, %147 : vector<1x8x1xf32>
    %149 = vector.broadcast %148 : vector<1x8x1xf32> to vector<1x8x32xf32>
    %150 = arith.subf %140, %149 : vector<1x8x32xf32>
    %151 = arith.mulf %150, %150 : vector<1x8x32xf32>
    %cst_55 = arith.constant dense<0.000000e+00> : vector<1x8xf32>
    %152 = vector.multi_reduction <add>, %151, %cst_55 [2] : vector<1x8x32xf32> to vector<1x8xf32>
    %153 = vector.shape_cast %152 : vector<1x8xf32> to vector<1x8x1xf32>
    %cst_56 = arith.constant 3.200000e+01 : f32
    %154 = vector.broadcast %cst_56 : f32 to vector<1x8x1xf32>
    %155 = arith.divf %153, %154 : vector<1x8x1xf32>
    %156 = vector.broadcast %148 : vector<1x8x1xf32> to vector<1x8x32xf32>
    %157 = arith.subf %140, %156 : vector<1x8x32xf32>
    %cst_57 = arith.constant 9.99999974E-6 : f32
    %158 = vector.broadcast %cst_57 : f32 to vector<1x8x1xf32>
    %159 = arith.addf %155, %158 : vector<1x8x1xf32>
    %160 = math.rsqrt %159 : vector<1x8x1xf32>
    %161 = vector.broadcast %160 : vector<1x8x1xf32> to vector<1x8x32xf32>
    %162 = arith.mulf %157, %161 : vector<1x8x32xf32>
    %163 = vector.shape_cast %142 : vector<1x32xf32> to vector<1x1x32xf32>
    %164 = vector.broadcast %163 : vector<1x1x32xf32> to vector<1x8x32xf32>
    %165 = arith.mulf %162, %164 : vector<1x8x32xf32>
    %166 = vector.shape_cast %144 : vector<1x32xf32> to vector<1x1x32xf32>
    %167 = vector.broadcast %166 : vector<1x1x32xf32> to vector<1x8x32xf32>
    %168 = arith.addf %165, %167 : vector<1x8x32xf32>
    %169 = vector.shape_cast %168 : vector<1x8x32xf32> to vector<8x32xf32>
    %170 = arith.truncf %169 : vector<8x32xf32> to vector<8x32xbf16>
    %c0_58 = arith.constant 0 : index
    %c0_59 = arith.constant 0 : index
    %c0_60 = arith.constant 0 : index
    %171 = vector.load %arg11[%c0_58, %c0_59, %c0_60] : memref<1x32x128xbf16, #tpu.memory_space<vmem>>, vector<1x32x128xbf16>
    %172 = vector.shape_cast %171 : vector<1x32x128xbf16> to vector<32x128xbf16>
    %cst_61 = arith.constant dense<0.000000e+00> : vector<8x128xf32>
    %173 = tpu.matmul %170, %172, %cst_61 {dimension_numbers = #tpu.dot_dimension_numbers<[1], [0], [0], [1], [0, 0, 1, 1], [], []>} : vector<8x32xbf16>, vector<32x128xbf16>, vector<8x128xf32> -> vector<8x128xf32>
    %c0_62 = arith.constant 0 : index
    %c0_63 = arith.constant 0 : index
    %c0_64 = arith.constant 0 : index
    %174 = vector.load %arg12[%c0_62, %c0_63, %c0_64] : memref<1x1x128xf32, #tpu.memory_space<vmem>>, vector<1x1x128xf32>
    %175 = vector.shape_cast %174 : vector<1x1x128xf32> to vector<1x128xf32>
    %176 = vector.broadcast %175 : vector<1x128xf32> to vector<8x128xf32>
    %177 = arith.addf %173, %176 : vector<8x128xf32>
    %cst_65 = arith.constant 0.636619746 : f32
    %178 = math.sqrt %cst_65 : f32
    %cst_66 = arith.constant 5.000000e-01 : f32
    %179 = vector.broadcast %cst_66 : f32 to vector<8x128xf32>
    %180 = arith.mulf %179, %177 : vector<8x128xf32>
    %cst_67 = arith.constant 4.471500e-02 : f32
    %181 = vector.broadcast %cst_67 : f32 to vector<8x128xf32>
    %182 = arith.mulf %181, %177 : vector<8x128xf32>
    %183 = arith.mulf %182, %177 : vector<8x128xf32>
    %184 = arith.mulf %183, %177 : vector<8x128xf32>
    %185 = arith.addf %177, %184 : vector<8x128xf32>
    %186 = vector.broadcast %178 : f32 to vector<8x128xf32>
    %187 = arith.mulf %186, %185 : vector<8x128xf32>
    %188 = math.tanh %187 : vector<8x128xf32>
    %cst_68 = arith.constant 1.000000e+00 : f32
    %189 = vector.broadcast %cst_68 : f32 to vector<8x128xf32>
    %190 = arith.addf %189, %188 : vector<8x128xf32>
    %191 = arith.mulf %180, %190 : vector<8x128xf32>
    %192 = arith.truncf %191 : vector<8x128xf32> to vector<8x128xbf16>
    %c0_69 = arith.constant 0 : index
    %c0_70 = arith.constant 0 : index
    %c0_71 = arith.constant 0 : index
    %193 = vector.load %arg13[%c0_69, %c0_70, %c0_71] : memref<1x128x32xbf16, #tpu.memory_space<vmem>>, vector<1x128x32xbf16>
    %194 = vector.shape_cast %193 : vector<1x128x32xbf16> to vector<128x32xbf16>
    %cst_72 = arith.constant dense<0.000000e+00> : vector<8x32xf32>
    %195 = tpu.matmul %192, %194, %cst_72 {dimension_numbers = #tpu.dot_dimension_numbers<[1], [0], [0], [1], [0, 0, 1, 1], [], []>} : vector<8x128xbf16>, vector<128x32xbf16>, vector<8x32xf32> -> vector<8x32xf32>
    %c0_73 = arith.constant 0 : index
    %c0_74 = arith.constant 0 : index
    %c0_75 = arith.constant 0 : index
    %196 = vector.load %arg14[%c0_73, %c0_74, %c0_75] : memref<1x1x32xf32, #tpu.memory_space<vmem>>, vector<1x1x32xf32>
    %197 = vector.shape_cast %196 : vector<1x1x32xf32> to vector<1x32xf32>
    %198 = vector.broadcast %197 : vector<1x32xf32> to vector<8x32xf32>
    %199 = arith.addf %195, %198 : vector<8x32xf32>
    %200 = vector.shape_cast %199 : vector<8x32xf32> to vector<1x8x32xf32>
    %201 = arith.addf %140, %200 : vector<1x8x32xf32>
    %c0_76 = arith.constant 0 : index
    %c0_77 = arith.constant 0 : index
    %c0_78 = arith.constant 0 : index
    %202 = vector.load %arg15[%c0_76, %c0_77, %c0_78] : memref<1x8x32xf32, #tpu.memory_space<vmem>>, vector<1x8x32xf32>
    tpu.vector_store %arg15[%c0_76, %c0_77, %c0_78], %201 {strides = array<i32>} : memref<1x8x32xf32, #tpu.memory_space<vmem>>, vector<1x8x32xf32>,
    return
  }
  func.func @transform_0(%arg0: i32, %arg1: i32) -> (i32, i32, i32) {
    %c0_i32 = arith.constant 0 : i32
    %c0_i32_0 = arith.constant 0 : i32
    %c0_i32_1 = arith.constant 0 : i32
    return %arg0, %c0_i32, %c0_i32_0 : i32, i32, i32
  }
  func.func @transform_1(%arg0: i32, %arg1: i32) -> (i32, i32, i32) {
    %c0_i32 = arith.constant 0 : i32
    %c0_i32_0 = arith.constant 0 : i32
    %c0_i32_1 = arith.constant 0 : i32
    return %arg1, %c0_i32, %c0_i32_0 : i32, i32, i32
  }
  func.func @transform_2(%arg0: i32, %arg1: i32) -> (i32, i32, i32) {
    %c0_i32 = arith.constant 0 : i32
    %c0_i32_0 = arith.constant 0 : i32
    %c0_i32_1 = arith.constant 0 : i32
    return %arg1, %c0_i32, %c0_i32_0 : i32, i32, i32
  }
  func.func @transform_3(%arg0: i32, %arg1: i32) -> (i32, i32, i32) {
    %c0_i32 = arith.constant 0 : i32
    %c0_i32_0 = arith.constant 0 : i32
    %c0_i32_1 = arith.constant 0 : i32
    return %arg1, %c0_i32, %c0_i32_0 : i32, i32, i32
  }
  func.func @transform_4(%arg0: i32, %arg1: i32) -> (i32, i32, i32) {
    %c0_i32 = arith.constant 0 : i32
    %c0_i32_0 = arith.constant 0 : i32
    %c0_i32_1 = arith.constant 0 : i32
    return %arg1, %c0_i32, %c0_i32_0 : i32, i32, i32
  }
  func.func @transform_5(%arg0: i32, %arg1: i32) -> (i32, i32, i32) {
    %c0_i32 = arith.constant 0 : i32
    %c0_i32_0 = arith.constant 0 : i32
    %c0_i32_1 = arith.constant 0 : i32
    return %arg1, %c0_i32, %c0_i32_0 : i32, i32, i32
  }
  func.func @transform_6(%arg0: i32, %arg1: i32) -> (i32, i32, i32) {
    %c0_i32 = arith.constant 0 : i32
    %c0_i32_0 = arith.constant 0 : i32
    %c0_i32_1 = arith.constant 0 : i32
    return %arg1, %c0_i32, %c0_i32_0 : i32, i32, i32
  }
  func.func @transform_7(%arg0: i32, %arg1: i32) -> (i32, i32, i32) {
    %c0_i32 = arith.constant 0 : i32
    %c0_i32_0 = arith.constant 0 : i32
    %c0_i32_1 = arith.constant 0 : i32
    return %arg1, %c0_i32, %c0_i32_0 : i32, i32, i32
  }
  func.func @transform_8(%arg0: i32, %arg1: i32) -> (i32, i32, i32) {
    %c0_i32 = arith.constant 0 : i32
    %c0_i32_0 = arith.constant 0 : i32
    %c0_i32_1 = arith.constant 0 : i32
    return %arg1, %c0_i32, %c0_i32_0 : i32, i32, i32
  }
  func.func @transform_9(%arg0: i32, %arg1: i32) -> (i32, i32, i32) {
    %c0_i32 = arith.constant 0 : i32
    %c0_i32_0 = arith.constant 0 : i32
    %c0_i32_1 = arith.constant 0 : i32
    return %arg1, %c0_i32, %c0_i32_0 : i32, i32, i32
  }
  func.func @transform_10(%arg0: i32, %arg1: i32) -> (i32, i32, i32) {
    %c0_i32 = arith.constant 0 : i32
    %c0_i32_0 = arith.constant 0 : i32
    %c0_i32_1 = arith.constant 0 : i32
    return %arg1, %c0_i32, %c0_i32_0 : i32, i32, i32
  }
  func.func @transform_11(%arg0: i32, %arg1: i32) -> (i32, i32, i32) {
    %c0_i32 = arith.constant 0 : i32
    %c0_i32_0 = arith.constant 0 : i32
    %c0_i32_1 = arith.constant 0 : i32
    return %arg1, %c0_i32, %c0_i32_0 : i32, i32, i32
  }
  func.func @transform_12(%arg0: i32, %arg1: i32) -> (i32, i32, i32) {
    %c0_i32 = arith.constant 0 : i32
    %c0_i32_0 = arith.constant 0 : i32
    %c0_i32_1 = arith.constant 0 : i32
    return %arg1, %c0_i32, %c0_i32_0 : i32, i32, i32
  }
  func.func @transform_13(%arg0: i32, %arg1: i32) -> (i32, i32, i32) {
    %c0_i32 = arith.constant 0 : i32
    %c0_i32_0 = arith.constant 0 : i32
    %c0_i32_1 = arith.constant 0 : i32
    return %arg0, %c0_i32, %c0_i32_0 : i32, i32, i32
  }
}

</mosaic_0001>

<llo_original>
// kernel: tpu_custom_call.1
$region0: #{tpu_custom_call.1}
  #allocation0 [shape = 'u32[]', space=smem, size = 0x4, offset = 0x4, fixed_abs, tag = 'smem constant byte address 0x4 - core index']
  #allocation1 [shape = 'u32[72,128]{1,0:T(1,128)}', space=vmem, size = 0x9000, scoped, tag = 'internal scratch']
  %s0 = inlined_call_operand.vmem [shape: f32[2,8,32], index: 0, kind: input, shape index: {}]
  %s1 = inlined_call_operand.vmem [shape: f32[2,1,32], index: 1, kind: input, shape index: {}]
  %s2 = inlined_call_operand.vmem [shape: f32[2,1,32], index: 2, kind: input, shape index: {}]
  %s3 = inlined_call_operand.vmem [shape: bf16[2,32,96], index: 3, kind: input, shape index: {}]
  %s4 = inlined_call_operand.vmem [shape: f32[2,1,96], index: 4, kind: input, shape index: {}]
  %s5 = inlined_call_operand.vmem [shape: bf16[2,32,32], index: 5, kind: input, shape index: {}]
  %s6 = inlined_call_operand.vmem [shape: f32[2,1,32], index: 6, kind: input, shape index: {}]
  %s7 = inlined_call_operand.vmem [shape: f32[2,1,32], index: 7, kind: input, shape index: {}]
  %s8 = inlined_call_operand.vmem [shape: f32[2,1,32], index: 8, kind: input, shape index: {}]
  %s9 = inlined_call_operand.vmem [shape: bf16[2,32,128], index: 9, kind: input, shape index: {}]
  %s10 = inlined_call_operand.vmem [shape: f32[2,1,128], index: 10, kind: input, shape index: {}]
  %s11 = inlined_call_operand.vmem [shape: bf16[2,128,32], index: 11, kind: input, shape index: {}]
  %s12 = inlined_call_operand.vmem [shape: f32[2,1,32], index: 12, kind: input, shape index: {}]
  %s13 = inlined_call_operand.hbm [shape: f32[2,8,32], index: 13, kind: output, shape index: {}]
  %s14 = sld [smem:[#allocation0]]
  $region89: #{tpu_custom_call.1} parent=0
    _
  %s16 = ssub.s32 1, %s14
  %s17 = scalar_select 0, %s16, %s14
  $region1: #{tpu_custom_call.1} parent=0
    #allocation2 [shape = 'u8[8192]{0}', space=vmem, size = 0x2000, scoped, tag = 'output window, operand 0']
    #allocation3 [shape = 's32[2]{0}', space=sflag, size = 0x8, scoped, tag = 'scoped memory for tpu_custom_call.1']
    %18 = vsyncpa [#allocation3], 0
    %s19 = scalar_lea.sflag [#allocation3], 1
    %20 = vsyncpa %s19, 0
    loop: start=0, step=1, limit=6
    $region2: #{tpu_custom_call.1} parent=1 // loop_pre_header
      _
    $region3: #{tpu_custom_call.1} parent=1 // loop_header
      %s22 = sphi 0, %s26
      %p23 = scmp.ge.s32.totalorder %s22, 6
      %s29 = sphi 0, %s41
      %s30 = sphi 0, %s37
      %s31 = sphi 0, %s29
      %s32 = sphi 0, %s30
      %s33 = sphi 0, %s31
      %s34 = sphi 0, %s32
      %s44 = sphi 0, %s46
      %s47 = sphi 0, %s44
      %s48 = sphi 0, %s47
      %s64 = sphi 0, %s48
      %s70 = sphi 0, %s72
      %s73 = sphi 0, %s70
      %s74 = sphi 0, %s73
      %s90 = sphi 0, %s74
      %s96 = sphi 0, %s98
      %s99 = sphi 0, %s96
      %s100 = sphi 0, %s99
      %s116 = sphi 0, %s100
      %s122 = sphi 0, %s124
      %s125 = sphi 0, %s122
      %s126 = sphi 0, %s125
      %s142 = sphi 0, %s126
      %s148 = sphi 0, %s150
      %s151 = sphi 0, %s148
      %s152 = sphi 0, %s151
      %s168 = sphi 0, %s152
      %s174 = sphi 0, %s176
      %s177 = sphi 0, %s174
      %s178 = sphi 0, %s177
      %s194 = sphi 0, %s178
      %s200 = sphi 0, %s202
      %s203 = sphi 0, %s200
      %s204 = sphi 0, %s203
      %s220 = sphi 0, %s204
      %s226 = sphi 0, %s228
      %s229 = sphi 0, %s226
      %s230 = sphi 0, %s229
      %s246 = sphi 0, %s230
      %s252 = sphi 0, %s254
      %s255 = sphi 0, %s252
      %s256 = sphi 0, %s255
      %s272 = sphi 0, %s256
      %s278 = sphi 0, %s280
      %s281 = sphi 0, %s278
      %s282 = sphi 0, %s281
      %s298 = sphi 0, %s282
      %s304 = sphi 0, %s306
      %s307 = sphi 0, %s304
      %s308 = sphi 0, %s307
      %s324 = sphi 0, %s308
      %s330 = sphi 0, %s332
      %s333 = sphi 0, %s330
      %s334 = sphi 0, %s333
      %s350 = sphi 0, %s334
      %s356 = sphi 0, %s358
      %s359 = sphi 0, %s356
      %s360 = sphi 0, %s359
      %s376 = sphi 0, %s360
      %s382 = sphi 0, %s384
      %s385 = sphi 0, %s382
      %s386 = sphi 0, %s385
      %s402 = sphi 0, %s386
    $region4: #{tpu_custom_call.1} parent=1 // loop_header_branch
      %25 = sbr.rel (%p23) target = $region8
    $region5: #{tpu_custom_call.1} parent=1 // loop_body
      %s27 = ssub.s32 %s22, 1
      %s28 = ssub.s32 %s22, 2
      %s35 = sadd.s32 1, %s30
      %p36 = scmp.ge.s32.totalorder %s35, 2
      %s37 = scalar_select %p36, 0, %s35
      %s38 = sadd.s32 1, %s29
      %s39 = scalar_select %p36, %s38, %s29
      %p40 = scmp.ge.s32.totalorder %s39, 2
      %s41 = scalar_select %p40, 0, %s39
      %s42 = ssub.s32 %s29, %s41
      %p43 = scmp.eq.s32.totalorder %s42, 0
      %s45 = sadd.s32 %s44, 1
      %s46 = scalar_select %p43, %s44, %s45
      %p49 = pneg %p43
      %p50 = scmp.eq.s32.totalorder %s22, 3
      %p51 = por %p49, %p50
      %p52 = scmp.ne.s32.totalorder %s44, %s47
      %p53 = scmp.eq.s32.totalorder %s22, 0
      %p54 = por %p52, %p53
      %p55 = scmp.ne.s32.totalorder %s44, %s47
      %p56 = scmp.eq.s32.totalorder %s27, 3
      %p57 = por %p55, %p56
      %p58 = scmp.ne.s32.totalorder %s47, %s48
      %p59 = scmp.eq.s32.totalorder %s27, 0
      %p60 = por %p58, %p59
      %p61 = scmp.ne.s32.totalorder %s47, %s48
      %p62 = scmp.eq.s32.totalorder %s28, 3
      %p63 = por %p61, %p62
      %p65 = scmp.ne.s32.totalorder %s48, %s64
      %p66 = scmp.eq.s32.totalorder %s28, 0
      %p67 = por %p65, %p66
      %s68 = ssub.s32 %s30, %s37
      %p69 = scmp.eq.s32.totalorder %s68, 0
      %s71 = sadd.s32 %s70, 1
      %s72 = scalar_select %p69, %s70, %s71
      %p75 = pneg %p69
      %p76 = scmp.eq.s32.totalorder %s22, 3
      %p77 = por %p75, %p76
      %p78 = scmp.ne.s32.totalorder %s70, %s73
      %p79 = scmp.eq.s32.totalorder %s22, 0
      %p80 = por %p78, %p79
      %p81 = scmp.ne.s32.totalorder %s70, %s73
      %p82 = scmp.eq.s32.totalorder %s27, 3
      %p83 = por %p81, %p82
      %p84 = scmp.ne.s32.totalorder %s73, %s74
      %p85 = scmp.eq.s32.totalorder %s27, 0
      %p86 = por %p84, %p85
      %p87 = scmp.ne.s32.totalorder %s73, %s74
      %p88 = scmp.eq.s32.totalorder %s28, 3
      %p89 = por %p87, %p88
      %p91 = scmp.ne.s32.totalorder %s74, %s90
      %p92 = scmp.eq.s32.totalorder %s28, 0
      %p93 = por %p91, %p92
      %s94 = ssub.s32 %s30, %s37
      %p95 = scmp.eq.s32.totalorder %s94, 0
      %s97 = sadd.s32 %s96, 1
      %s98 = scalar_select %p95, %s96, %s97
      %p101 = pneg %p95
      %p102 = scmp.eq.s32.totalorder %s22, 3
      %p103 = por %p101, %p102
      %p104 = scmp.ne.s32.totalorder %s96, %s99
      %p105 = scmp.eq.s32.totalorder %s22, 0
      %p106 = por %p104, %p105
      %p107 = scmp.ne.s32.totalorder %s96, %s99
      %p108 = scmp.eq.s32.totalorder %s27, 3
      %p109 = por %p107, %p108
      %p110 = scmp.ne.s32.totalorder %s99, %s100
      %p111 = scmp.eq.s32.totalorder %s27, 0
      %p112 = por %p110, %p111
      %p113 = scmp.ne.s32.totalorder %s99, %s100
      %p114 = scmp.eq.s32.totalorder %s28, 3
      %p115 = por %p113, %p114
      %p117 = scmp.ne.s32.totalorder %s100, %s116
      %p118 = scmp.eq.s32.totalorder %s28, 0
      %p119 = por %p117, %p118
      %s120 = ssub.s32 %s30, %s37
      %p121 = scmp.eq.s32.totalorder %s120, 0
      %s123 = sadd.s32 %s122, 1
      %s124 = scalar_select %p121, %s122, %s123
      %p127 = pneg %p121
      %p128 = scmp.eq.s32.totalorder %s22, 3
      %p129 = por %p127, %p128
      %p130 = scmp.ne.s32.totalorder %s122, %s125
      %p131 = scmp.eq.s32.totalorder %s22, 0
      %p132 = por %p130, %p131
      %p133 = scmp.ne.s32.totalorder %s122, %s125
      %p134 = scmp.eq.s32.totalorder %s27, 3
      %p135 = por %p133, %p134
      %p136 = scmp.ne.s32.totalorder %s125, %s126
      %p137 = scmp.eq.s32.totalorder %s27, 0
      %p138 = por %p136, %p137
      %p139 = scmp.ne.s32.totalorder %s125, %s126
      %p140 = scmp.eq.s32.totalorder %s28, 3
      %p141 = por %p139, %p140
      %p143 = scmp.ne.s32.totalorder %s126, %s142
      %p144 = scmp.eq.s32.totalorder %s28, 0
      %p145 = por %p143, %p144
      %s146 = ssub.s32 %s30, %s37
      %p147 = scmp.eq.s32.totalorder %s146, 0
      %s149 = sadd.s32 %s148, 1
      %s150 = scalar_select %p147, %s148, %s149
      %p153 = pneg %p147
      %p154 = scmp.eq.s32.totalorder %s22, 3
      %p155 = por %p153, %p154
      %p156 = scmp.ne.s32.totalorder %s148, %s151
      %p157 = scmp.eq.s32.totalorder %s22, 0
      %p158 = por %p156, %p157
      %p159 = scmp.ne.s32.totalorder %s148, %s151
      %p160 = scmp.eq.s32.totalorder %s27, 3
      %p161 = por %p159, %p160
      %p162 = scmp.ne.s32.totalorder %s151, %s152
      %p163 = scmp.eq.s32.totalorder %s27, 0
      %p164 = por %p162, %p163
      %p165 = scmp.ne.s32.totalorder %s151, %s152
      %p166 = scmp.eq.s32.totalorder %s28, 3
      %p167 = por %p165, %p166
      %p169 = scmp.ne.s32.totalorder %s152, %s168
      %p170 = scmp.eq.s32.totalorder %s28, 0
      %p171 = por %p169, %p170
      %s172 = ssub.s32 %s30, %s37
      %p173 = scmp.eq.s32.totalorder %s172, 0
      %s175 = sadd.s32 %s174, 1
      %s176 = scalar_select %p173, %s174, %s175
      %p179 = pneg %p173
      %p180 = scmp.eq.s32.totalorder %s22, 3
      %p181 = por %p179, %p180
      %p182 = scmp.ne.s32.totalorder %s174, %s177
      %p183 = scmp.eq.s32.totalorder %s22, 0
      %p184 = por %p182, %p183
      %p185 = scmp.ne.s32.totalorder %s174, %s177
      %p186 = scmp.eq.s32.totalorder %s27, 3
      %p187 = por %p185, %p186
      %p188 = scmp.ne.s32.totalorder %s177, %s178
      %p189 = scmp.eq.s32.totalorder %s27, 0
      %p190 = por %p188, %p189
      %p191 = scmp.ne.s32.totalorder %s177, %s178
      %p192 = scmp.eq.s32.totalorder %s28, 3
      %p193 = por %p191, %p192
      %p195 = scmp.ne.s32.totalorder %s178, %s194
      %p196 = scmp.eq.s32.totalorder %s28, 0
      %p197 = por %p195, %p196
      %s198 = ssub.s32 %s30, %s37
      %p199 = scmp.eq.s32.totalorder %s198, 0
      %s201 = sadd.s32 %s200, 1
      %s202 = scalar_select %p199, %s200, %s201
      %p205 = pneg %p199
      %p206 = scmp.eq.s32.totalorder %s22, 3
      %p207 = por %p205, %p206
      %p208 = scmp.ne.s32.totalorder %s200, %s203
      %p209 = scmp.eq.s32.totalorder %s22, 0
      %p210 = por %p208, %p209
      %p211 = scmp.ne.s32.totalorder %s200, %s203
      %p212 = scmp.eq.s32.totalorder %s27, 3
      %p213 = por %p211, %p212
      %p214 = scmp.ne.s32.totalorder %s203, %s204
      %p215 = scmp.eq.s32.totalorder %s27, 0
      %p216 = por %p214, %p215
      %p217 = scmp.ne.s32.totalorder %s203, %s204
      %p218 = scmp.eq.s32.totalorder %s28, 3
      %p219 = por %p217, %p218
      %p221 = scmp.ne.s32.totalorder %s204, %s220
      %p222 = scmp.eq.s32.totalorder %s28, 0
      %p223 = por %p221, %p222
      %s224 = ssub.s32 %s30, %s37
      %p225 = scmp.eq.s32.totalorder %s224, 0
      %s227 = sadd.s32 %s226, 1
      %s228 = scalar_select %p225, %s226, %s227
      %p231 = pneg %p225
      %p232 = scmp.eq.s32.totalorder %s22, 3
      %p233 = por %p231, %p232
      %p234 = scmp.ne.s32.totalorder %s226, %s229
      %p235 = scmp.eq.s32.totalorder %s22, 0
      %p236 = por %p234, %p235
      %p237 = scmp.ne.s32.totalorder %s226, %s229
      %p238 = scmp.eq.s32.totalorder %s27, 3
      %p239 = por %p237, %p238
      %p240 = scmp.ne.s32.totalorder %s229, %s230
      %p241 = scmp.eq.s32.totalorder %s27, 0
      %p242 = por %p240, %p241
      %p243 = scmp.ne.s32.totalorder %s229, %s230
      %p244 = scmp.eq.s32.totalorder %s28, 3
      %p245 = por %p243, %p244
      %p247 = scmp.ne.s32.totalorder %s230, %s246
      %p248 = scmp.eq.s32.totalorder %s28, 0
      %p249 = por %p247, %p248
      %s250 = ssub.s32 %s30, %s37
      %p251 = scmp.eq.s32.totalorder %s250, 0
      %s253 = sadd.s32 %s252, 1
      %s254 = scalar_select %p251, %s252, %s253
      %p257 = pneg %p251
      %p258 = scmp.eq.s32.totalorder %s22, 3
      %p259 = por %p257, %p258
      %p260 = scmp.ne.s32.totalorder %s252, %s255
      %p261 = scmp.eq.s32.totalorder %s22, 0
      %p262 = por %p260, %p261
      %p263 = scmp.ne.s32.totalorder %s252, %s255
      %p264 = scmp.eq.s32.totalorder %s27, 3
      %p265 = por %p263, %p264
      %p266 = scmp.ne.s32.totalorder %s255, %s256
      %p267 = scmp.eq.s32.totalorder %s27, 0
      %p268 = por %p266, %p267
      %p269 = scmp.ne.s32.totalorder %s255, %s256
      %p270 = scmp.eq.s32.totalorder %s28, 3
      %p271 = por %p269, %p270
      %p273 = scmp.ne.s32.totalorder %s256, %s272
      %p274 = scmp.eq.s32.totalorder %s28, 0
      %p275 = por %p273, %p274
      %s276 = ssub.s32 %s30, %s37
      %p277 = scmp.eq.s32.totalorder %s276, 0
      %s279 = sadd.s32 %s278, 1
      %s280 = scalar_select %p277, %s278, %s279
      %p283 = pneg %p277
      %p284 = scmp.eq.s32.totalorder %s22, 3
      %p285 = por %p283, %p284
      %p286 = scmp.ne.s32.totalorder %s278, %s281
      %p287 = scmp.eq.s32.totalorder %s22, 0
      %p288 = por %p286, %p287
      %p289 = scmp.ne.s32.totalorder %s278, %s281
      %p290 = scmp.eq.s32.totalorder %s27, 3
      %p291 = por %p289, %p290
      %p292 = scmp.ne.s32.totalorder %s281, %s282
      %p293 = scmp.eq.s32.totalorder %s27, 0
      %p294 = por %p292, %p293
      %p295 = scmp.ne.s32.totalorder %s281, %s282
      %p296 = scmp.eq.s32.totalorder %s28, 3
      %p297 = por %p295, %p296
      %p299 = scmp.ne.s32.totalorder %s282, %s298
      %p300 = scmp.eq.s32.totalorder %s28, 0
      %p301 = por %p299, %p300
      %s302 = ssub.s32 %s30, %s37
      %p303 = scmp.eq.s32.totalorder %s302, 0
      %s305 = sadd.s32 %s304, 1
      %s306 = scalar_select %p303, %s304, %s305
      %p309 = pneg %p303
      %p310 = scmp.eq.s32.totalorder %s22, 3
      %p311 = por %p309, %p310
      %p312 = scmp.ne.s32.totalorder %s304, %s307
      %p313 = scmp.eq.s32.totalorder %s22, 0
      %p314 = por %p312, %p313
      %p315 = scmp.ne.s32.totalorder %s304, %s307
      %p316 = scmp.eq.s32.totalorder %s27, 3
      %p317 = por %p315, %p316
      %p318 = scmp.ne.s32.totalorder %s307, %s308
      %p319 = scmp.eq.s32.totalorder %s27, 0
      %p320 = por %p318, %p319
      %p321 = scmp.ne.s32.totalorder %s307, %s308
      %p322 = scmp.eq.s32.totalorder %s28, 3
      %p323 = por %p321, %p322
      %p325 = scmp.ne.s32.totalorder %s308, %s324
      %p326 = scmp.eq.s32.totalorder %s28, 0
      %p327 = por %p325, %p326
      %s328 = ssub.s32 %s30, %s37
      %p329 = scmp.eq.s32.totalorder %s328, 0
      %s331 = sadd.s32 %s330, 1
      %s332 = scalar_select %p329, %s330, %s331
      %p335 = pneg %p329
      %p336 = scmp.eq.s32.totalorder %s22, 3
      %p337 = por %p335, %p336
      %p338 = scmp.ne.s32.totalorder %s330, %s333
      %p339 = scmp.eq.s32.totalorder %s22, 0
      %p340 = por %p338, %p339
      %p341 = scmp.ne.s32.totalorder %s330, %s333
      %p342 = scmp.eq.s32.totalorder %s27, 3
      %p343 = por %p341, %p342
      %p344 = scmp.ne.s32.totalorder %s333, %s334
      %p345 = scmp.eq.s32.totalorder %s27, 0
      %p346 = por %p344, %p345
      %p347 = scmp.ne.s32.totalorder %s333, %s334
      %p348 = scmp.eq.s32.totalorder %s28, 3
      %p349 = por %p347, %p348
      %p351 = scmp.ne.s32.totalorder %s334, %s350
      %p352 = scmp.eq.s32.totalorder %s28, 0
      %p353 = por %p351, %p352
      %s354 = ssub.s32 %s30, %s37
      %p355 = scmp.eq.s32.totalorder %s354, 0
      %s357 = sadd.s32 %s356, 1
      %s358 = scalar_select %p355, %s356, %s357
      %p361 = pneg %p355
      %p362 = scmp.eq.s32.totalorder %s22, 3
      %p363 = por %p361, %p362
      %p364 = scmp.ne.s32.totalorder %s356, %s359
      %p365 = scmp.eq.s32.totalorder %s22, 0
      %p366 = por %p364, %p365
      %p367 = scmp.ne.s32.totalorder %s356, %s359
      %p368 = scmp.eq.s32.totalorder %s27, 3
      %p369 = por %p367, %p368
      %p370 = scmp.ne.s32.totalorder %s359, %s360
      %p371 = scmp.eq.s32.totalorder %s27, 0
      %p372 = por %p370, %p371
      %p373 = scmp.ne.s32.totalorder %s359, %s360
      %p374 = scmp.eq.s32.totalorder %s28, 3
      %p375 = por %p373, %p374
      %p377 = scmp.ne.s32.totalorder %s360, %s376
      %p378 = scmp.eq.s32.totalorder %s28, 0
      %p379 = por %p377, %p378
      %s380 = ssub.s32 %s29, %s41
      %p381 = scmp.eq.s32.totalorder %s380, 0
      %s383 = sadd.s32 %s382, 1
      %s384 = scalar_select %p381, %s382, %s383
      %p387 = pneg %p381
      %p388 = scmp.eq.s32.totalorder %s22, 3
      %p389 = por %p387, %p388
      %p390 = scmp.ne.s32.totalorder %s382, %s385
      %p391 = scmp.eq.s32.totalorder %s22, 0
      %p392 = por %p390, %p391
      %p393 = scmp.ne.s32.totalorder %s382, %s385
      %p394 = scmp.eq.s32.totalorder %s27, 3
      %p395 = por %p393, %p394
      %p396 = scmp.ne.s32.totalorder %s385, %s386
      %p397 = scmp.eq.s32.totalorder %s27, 0
      %p398 = por %p396, %p397
      %p399 = scmp.ne.s32.totalorder %s385, %s386
      %p400 = scmp.eq.s32.totalorder %s28, 3
      %p401 = por %p399, %p400
      %p403 = scmp.ne.s32.totalorder %s386, %s402
      %p404 = scmp.eq.s32.totalorder %s28, 0
      %p405 = por %p403, %p404
      %p406 = scmp.le.s32.totalorder 1, %s22
      %p407 = scmp.lt.s32.totalorder %s22, 5
      %p408 = pnand %p406, %p407
      %p409 = pneg %p408
      // Predicated region
      $region9: #{tpu_custom_call.1} parent=5 // pred_check
        _
      $region10: #{tpu_custom_call.1} parent=5 // pred_check_branch
        %411 = sbr.rel (%p408) target = $region12
      $region11: #{tpu_custom_call.1} parent=5 // pred_region
        %s412 = ssub.s32 %s22, 1
      $region12: #{tpu_custom_call.1} parent=5 // pred_fallthru
        _
      %p413 = scmp.lt.s32.totalorder %s22, 4
      // Predicated region
      $region13: #{tpu_custom_call.1} parent=5 // pred_check
        %p414 = pneg %p413
      $region14: #{tpu_custom_call.1} parent=5 // pred_check_branch
        %416 = sbr.rel (%p414) target = $region16
      $region15: #{tpu_custom_call.1} parent=5 // pred_region
        // Predicated region
        $region17: #{tpu_custom_call.1} parent=15 // pred_check
          %p417 = pneg %p54
        $region18: #{tpu_custom_call.1} parent=15 // pred_check_branch
          %419 = sbr.rel (%p417) target = $region20
        $region19: #{tpu_custom_call.1} parent=15 // pred_region
          %p420 = scmp.lt.s32.totalorder %s29, 1
          %s421 = scalar_select %p420, %s29, 1
          %s422 = smul.addr %s421, 8
          %s423 = scalar_lea.vmem %s0, %s422
        $region20: #{tpu_custom_call.1} parent=15 // pred_fallthru
          _
        // Predicated region
        $region21: #{tpu_custom_call.1} parent=15 // pred_check
          %p424 = pneg %p80
        $region22: #{tpu_custom_call.1} parent=15 // pred_check_branch
          %426 = sbr.rel (%p424) target = $region24
        $region23: #{tpu_custom_call.1} parent=15 // pred_region
          %p427 = scmp.lt.s32.totalorder %s30, 1
          %s428 = scalar_select %p427, %s30, 1
          %s429 = scalar_lea.vmem %s1, %s428
        $region24: #{tpu_custom_call.1} parent=15 // pred_fallthru
          _
        // Predicated region
        $region25: #{tpu_custom_call.1} parent=15 // pred_check
          %p430 = pneg %p106
        $region26: #{tpu_custom_call.1} parent=15 // pred_check_branch
          %432 = sbr.rel (%p430) target = $region28
        $region27: #{tpu_custom_call.1} parent=15 // pred_region
          %p433 = scmp.lt.s32.totalorder %s30, 1
          %s434 = scalar_select %p433, %s30, 1
          %s435 = scalar_lea.vmem %s2, %s434
        $region28: #{tpu_custom_call.1} parent=15 // pred_fallthru
          _
        // Predicated region
        $region29: #{tpu_custom_call.1} parent=15 // pred_check
          %p436 = pneg %p132
        $region30: #{tpu_custom_call.1} parent=15 // pred_check_branch
          %438 = sbr.rel (%p436) target = $region32
        $region31: #{tpu_custom_call.1} parent=15 // pred_region
          %p439 = scmp.lt.s32.totalorder %s30, 1
          %s440 = scalar_select %p439, %s30, 1
          %s441 = smul.addr %s440, 4
          %s442 = smul.addr %s441, 4
          %s443 = scalar_lea.vmem %s3, %s442
        $region32: #{tpu_custom_call.1} parent=15 // pred_fallthru
          _
        // Predicated region
        $region33: #{tpu_custom_call.1} parent=15 // pred_check
          %p444 = pneg %p158
        $region34: #{tpu_custom_call.1} parent=15 // pred_check_branch
          %446 = sbr.rel (%p444) target = $region36
        $region35: #{tpu_custom_call.1} parent=15 // pred_region
          %p447 = scmp.lt.s32.totalorder %s30, 1
          %s448 = scalar_select %p447, %s30, 1
          %s449 = scalar_lea.vmem %s4, %s448
        $region36: #{tpu_custom_call.1} parent=15 // pred_fallthru
          _
        // Predicated region
        $region37: #{tpu_custom_call.1} parent=15 // pred_check
          %p450 = pneg %p184
        $region38: #{tpu_custom_call.1} parent=15 // pred_check_branch
          %452 = sbr.rel (%p450) target = $region40
        $region39: #{tpu_custom_call.1} parent=15 // pred_region
          %p453 = scmp.lt.s32.totalorder %s30, 1
          %s454 = scalar_select %p453, %s30, 1
          %s455 = smul.addr %s454, 4
          %s456 = smul.addr %s455, 4
          %s457 = scalar_lea.vmem %s5, %s456
        $region40: #{tpu_custom_call.1} parent=15 // pred_fallthru
          _
        // Predicated region
        $region41: #{tpu_custom_call.1} parent=15 // pred_check
          %p458 = pneg %p210
        $region42: #{tpu_custom_call.1} parent=15 // pred_check_branch
          %460 = sbr.rel (%p458) target = $region44
        $region43: #{tpu_custom_call.1} parent=15 // pred_region
          %p461 = scmp.lt.s32.totalorder %s30, 1
          %s462 = scalar_select %p461, %s30, 1
          %s463 = scalar_lea.vmem %s6, %s462
        $region44: #{tpu_custom_call.1} parent=15 // pred_fallthru
          _
        // Predicated region
        $region45: #{tpu_custom_call.1} parent=15 // pred_check
          %p464 = pneg %p236
        $region46: #{tpu_custom_call.1} parent=15 // pred_check_branch
          %466 = sbr.rel (%p464) target = $region48
        $region47: #{tpu_custom_call.1} parent=15 // pred_region
          %p467 = scmp.lt.s32.totalorder %s30, 1
          %s468 = scalar_select %p467, %s30, 1
          %s469 = scalar_lea.vmem %s7, %s468
        $region48: #{tpu_custom_call.1} parent=15 // pred_fallthru
          _
        // Predicated region
        $region49: #{tpu_custom_call.1} parent=15 // pred_check
          %p470 = pneg %p262
        $region50: #{tpu_custom_call.1} parent=15 // pred_check_branch
          %472 = sbr.rel (%p470) target = $region52
        $region51: #{tpu_custom_call.1} parent=15 // pred_region
          %p473 = scmp.lt.s32.totalorder %s30, 1
          %s474 = scalar_select %p473, %s30, 1
          %s475 = scalar_lea.vmem %s8, %s474
        $region52: #{tpu_custom_call.1} parent=15 // pred_fallthru
          _
        // Predicated region
        $region53: #{tpu_custom_call.1} parent=15 // pred_check
          %p476 = pneg %p288
        $region54: #{tpu_custom_call.1} parent=15 // pred_check_branch
          %478 = sbr.rel (%p476) target = $region56
        $region55: #{tpu_custom_call.1} parent=15 // pred_region
          %p479 = scmp.lt.s32.totalorder %s30, 1
          %s480 = scalar_select %p479, %s30, 1
          %s481 = smul.addr %s480, 4
          %s482 = smul.addr %s481, 4
          %s483 = scalar_lea.vmem %s9, %s482
        $region56: #{tpu_custom_call.1} parent=15 // pred_fallthru
          _
        // Predicated region
        $region57: #{tpu_custom_call.1} parent=15 // pred_check
          %p484 = pneg %p314
        $region58: #{tpu_custom_call.1} parent=15 // pred_check_branch
          %486 = sbr.rel (%p484) target = $region60
        $region59: #{tpu_custom_call.1} parent=15 // pred_region
          %p487 = scmp.lt.s32.totalorder %s30, 1
          %s488 = scalar_select %p487, %s30, 1
          %s489 = scalar_lea.vmem %s10, %s488
        $region60: #{tpu_custom_call.1} parent=15 // pred_fallthru
          _
        // Predicated region
        $region61: #{tpu_custom_call.1} parent=15 // pred_check
          %p490 = pneg %p340
        $region62: #{tpu_custom_call.1} parent=15 // pred_check_branch
          %492 = sbr.rel (%p490) target = $region64
        $region63: #{tpu_custom_call.1} parent=15 // pred_region
          %p493 = scmp.lt.s32.totalorder %s30, 1
          %s494 = scalar_select %p493, %s30, 1
          %s495 = smul.addr %s494, 16
          %s496 = smul.addr %s495, 4
          %s497 = scalar_lea.vmem %s11, %s496
        $region64: #{tpu_custom_call.1} parent=15 // pred_fallthru
          _
        // Predicated region
        $region65: #{tpu_custom_call.1} parent=15 // pred_check
          %p498 = pneg %p366
        $region66: #{tpu_custom_call.1} parent=15 // pred_check_branch
          %500 = sbr.rel (%p498) target = $region68
        $region67: #{tpu_custom_call.1} parent=15 // pred_region
          %p501 = scmp.lt.s32.totalorder %s30, 1
          %s502 = scalar_select %p501, %s30, 1
          %s503 = scalar_lea.vmem %s12, %s502
        $region68: #{tpu_custom_call.1} parent=15 // pred_fallthru
          _
      $region16: #{tpu_custom_call.1} parent=5 // pred_fallthru
        _
      %p504 = scmp.le.s32.totalorder 1, %s22
      %p505 = scmp.lt.s32.totalorder %s22, 5
      %p506 = pnand %p504, %p505
      %p507 = pneg %p506
      // Predicated region
      $region69: #{tpu_custom_call.1} parent=5 // pred_check
        _
      $region70: #{tpu_custom_call.1} parent=5 // pred_check_branch
        %509 = sbr.rel (%p506) target = $region72
      $region71: #{tpu_custom_call.1} parent=5 // pred_region
        %s510 = ssub.s32 %s22, 1
        %p511 = scmp.lt.s32.totalorder %s31, 1
        %s512 = scalar_select %p511, %s31, 1
        %s513 = smul.addr %s512, 8
        %s514 = scalar_lea.vmem %s0, %s513
        %p515 = pneg %p60
        %p516 = pneg %p57
        %p517 = scmp.lt.s32.totalorder %s32, 1
        %s518 = scalar_select %p517, %s32, 1
        %s519 = scalar_lea.vmem %s1, %s518
        %p520 = pneg %p86
        %p521 = pneg %p83
        %p522 = scmp.lt.s32.totalorder %s32, 1
        %s523 = scalar_select %p522, %s32, 1
        %s524 = scalar_lea.vmem %s2, %s523
        %p525 = pneg %p112
        %p526 = pneg %p109
        %p527 = scmp.lt.s32.totalorder %s32, 1
        %s528 = scalar_select %p527, %s32, 1
        %s529 = smul.addr %s528, 4
        %s530 = smul.addr %s529, 4
        %s531 = scalar_lea.vmem %s3, %s530
        %p532 = pneg %p138
        %p533 = pneg %p135
        %p534 = scmp.lt.s32.totalorder %s32, 1
        %s535 = scalar_select %p534, %s32, 1
        %s536 = scalar_lea.vmem %s4, %s535
        %p537 = pneg %p164
        %p538 = pneg %p161
        %p539 = scmp.lt.s32.totalorder %s32, 1
        %s540 = scalar_select %p539, %s32, 1
        %s541 = smul.addr %s540, 4
        %s542 = smul.addr %s541, 4
        %s543 = scalar_lea.vmem %s5, %s542
        %p544 = pneg %p190
        %p545 = pneg %p187
        %p546 = scmp.lt.s32.totalorder %s32, 1
        %s547 = scalar_select %p546, %s32, 1
        %s548 = scalar_lea.vmem %s6, %s547
        %p549 = pneg %p216
        %p550 = pneg %p213
        %p551 = scmp.lt.s32.totalorder %s32, 1
        %s552 = scalar_select %p551, %s32, 1
        %s553 = scalar_lea.vmem %s7, %s552
        %p554 = pneg %p242
        %p555 = pneg %p239
        %p556 = scmp.lt.s32.totalorder %s32, 1
        %s557 = scalar_select %p556, %s32, 1
        %s558 = scalar_lea.vmem %s8, %s557
        %p559 = pneg %p268
        %p560 = pneg %p265
        %p561 = scmp.lt.s32.totalorder %s32, 1
        %s562 = scalar_select %p561, %s32, 1
        %s563 = smul.addr %s562, 4
        %s564 = smul.addr %s563, 4
        %s565 = scalar_lea.vmem %s9, %s564
        %p566 = pneg %p294
        %p567 = pneg %p291
        %p568 = scmp.lt.s32.totalorder %s32, 1
        %s569 = scalar_select %p568, %s32, 1
        %s570 = scalar_lea.vmem %s10, %s569
        %p571 = pneg %p320
        %p572 = pneg %p317
        %p573 = scmp.lt.s32.totalorder %s32, 1
        %s574 = scalar_select %p573, %s32, 1
        %s575 = smul.addr %s574, 16
        %s576 = smul.addr %s575, 4
        %s577 = scalar_lea.vmem %s11, %s576
        %p578 = pneg %p346
        %p579 = pneg %p343
        %p580 = scmp.lt.s32.totalorder %s32, 1
        %s581 = scalar_select %p580, %s32, 1
        %s582 = scalar_lea.vmem %s12, %s581
        %p583 = pneg %p372
        %p584 = pneg %p369
        %p585 = pneg %p398
        %p586 = pneg %p395
        %s587 = sand.u32 %s385, 1
        %s588 = scalar_lea.sflag [#allocation3], %s587
        %s589 = sand.u32 %s385, 1
        %s590 = smul.addr %s589, 8
        %s591 = scalar_lea.vmem [#allocation2], %s590
        %p592 = scmp.lt.s32.totalorder %s31, 1
        %s593 = scalar_select %p592, %s31, 1
        %s594 = smul.addr %s593, 8
        %s595 = scalar_lea.vmem %s0, %s594
        %p596 = scmp.lt.s32.totalorder %s32, 1
        %s597 = scalar_select %p596, %s32, 1
        %s598 = scalar_lea.vmem %s1, %s597
        %p599 = scmp.lt.s32.totalorder %s32, 1
        %s600 = scalar_select %p599, %s32, 1
        %s601 = scalar_lea.vmem %s2, %s600
        %p602 = scmp.lt.s32.totalorder %s32, 1
        %s603 = scalar_select %p602, %s32, 1
        %s604 = smul.addr %s603, 4
        %s605 = smul.addr %s604, 4
        %s606 = scalar_lea.vmem %s3, %s605
        %p607 = scmp.lt.s32.totalorder %s32, 1
        %s608 = scalar_select %p607, %s32, 1
        %s609 = scalar_lea.vmem %s4, %s608
        %p610 = scmp.lt.s32.totalorder %s32, 1
        %s611 = scalar_select %p610, %s32, 1
        %s612 = smul.addr %s611, 4
        %s613 = smul.addr %s612, 4
        %s614 = scalar_lea.vmem %s5, %s613
        %p615 = scmp.lt.s32.totalorder %s32, 1
        %s616 = scalar_select %p615, %s32, 1
        %s617 = scalar_lea.vmem %s6, %s616
        %p618 = scmp.lt.s32.totalorder %s32, 1
        %s619 = scalar_select %p618, %s32, 1
        %s620 = scalar_lea.vmem %s7, %s619
        %p621 = scmp.lt.s32.totalorder %s32, 1
        %s622 = scalar_select %p621, %s32, 1
        %s623 = scalar_lea.vmem %s8, %s622
        %p624 = scmp.lt.s32.totalorder %s32, 1
        %s625 = scalar_select %p624, %s32, 1
        %s626 = smul.addr %s625, 4
        %s627 = smul.addr %s626, 4
        %s628 = scalar_lea.vmem %s9, %s627
        %p629 = scmp.lt.s32.totalorder %s32, 1
        %s630 = scalar_select %p629, %s32, 1
        %s631 = scalar_lea.vmem %s10, %s630
        %p632 = scmp.lt.s32.totalorder %s32, 1
        %s633 = scalar_select %p632, %s32, 1
        %s634 = smul.addr %s633, 16
        %s635 = smul.addr %s634, 4
        %s636 = scalar_lea.vmem %s11, %s635
        %p637 = scmp.lt.s32.totalorder %s32, 1
        %s638 = scalar_select %p637, %s32, 1
        %s639 = scalar_lea.vmem %s12, %s638
        %p641 = scmp.eq.s32.totalorder %s32, 0
        // Predicated region
        $region73: #{tpu_custom_call.1} parent=71 // pred_check
          %p642 = pneg %p641
        $region74: #{tpu_custom_call.1} parent=71 // pred_check_branch
          %644 = sbr.rel (%p642) target = $region76
        $region75: #{tpu_custom_call.1} parent=71 // pred_region
          %v645 = vld [vmem:[%s595] sm:$0xff]
          %vm646 = vcmask 261120
          %647 = vst.msk [vmem:[%s591] sm:$0xff] %vm646, %v645
        $region76: #{tpu_custom_call.1} parent=71 // pred_fallthru
          _
        %v648 = vld [vmem:[%s591] sm:$0xff]
        %v649 = vld [vmem:[%s598] sm:$0x1]
        %v650 = vld [vmem:[%s601] sm:$0x1]
        %vm651 = vcmask 261120
        %v652 = vsel %vm651, %v648, 0.0
        %653 = vadd.xlane.f32.xlu0 %v652
        %v654 = vpop.xlane.xlu0 %653
        %v655 = vrcp.pop 32.0
        %v656 = vmul.f32 32.0, %v655
        %v657 = vsub.f32 1.0, %v656
        %v658 = vmul.f32 %v655, %v657
        %v659 = vadd.f32 %v655, %v658
        %vm660 = vweird.f32 %v655
        %v661 = vsel %vm660, %v655, %v659
        %v662 = vmul.f32 %v654, %v661
        %v663 = vsub.f32 %v648, %v662
        %v664 = vmul.f32 %v663, %v663
        %v665 = vsel %vm651, %v664, 0.0
        %666 = vadd.xlane.f32.xlu0 %v665
        %v667 = vpop.xlane.xlu0 %666
        %v668 = vmul.f32 %v667, %v661
        %v669 = vadd.f32 %v668, 1e-05
        %v670 = vrsqrt.pop %v669
        %v671 = vmul.f32 %v670, %v669
        %v672 = vmul.f32 %v671, %v670
        %v673 = vmul.f32 0.5, %v672
        %v674 = vsub.f32 1.5, %v673
        %v675 = vmul.f32 %v670, %v674
        %vm676 = vweird.f32 %v669
        %vm677 = vweird.f32 %v670
        %vm678 = vmor %vm676, %vm677
        %v679 = vsel %vm678, %v670, %v675
        %v680 = vmul.f32 %v663, %v679
        %v682 = vperm.slane %v649, 0
        %v684 = vmul.f32 %v680, %v682
        %v686 = vperm.slane %v650, 0
        %v688 = vadd.f32 %v684, %v686
        %v689 = vpack.c.bf16 %v688, %v688
        %v690 = vld [vmem:[%s606] sm:$0xf]
        %v691 = vld [vmem:[%s606 + $0x4] sm:$0xf]
        %v692 = vld [vmem:[%s606 + $0x8] sm:$0xf]
        %v693 = vld [vmem:[%s606 + $0xc] sm:$0xf]
        %v694 = vld [vmem:[%s609] sm:$0x1]
        %v696 = vperm.slane %v694, 0
        %v702 = vunpack.c.l.b16 %v690
        %v703 = vunpack.c.l.b16 %v691
        %v704 = vunpack.c.l.b16 %v692
        %v705 = vunpack.c.l.b16 %v693
        %v706 = vpack.c.b16 %v703, %v702
        %v707 = vpack.c.b16 %v705, %v704
        %v711 = vsel %vm651, %v689, 0
        %713 = vmatpush.bf16.msra.mxu0 0
        %714 = vmatpush.bf16.msra.mxu0 0
        %715 = vmatpush.bf16.msra.mxu0 0
        %716 = vmatpush.bf16.msra.mxu0 0
        %717 = vmatpush.bf16.msra.mxu0 0
        %718 = vmatpush.bf16.msra.mxu0 0
        %719 = vmatpush.bf16.msra.mxu0 %v707
        %720 = vmatpush.bf16.msra.mxu0 %v706
        %721 = vmatmul.bf16.gmra.mxu0 %v711
        %v722 = vpop.f32.mrf.mxu0
        %v723 = vadd.f32 %v696, %v722
        %v724 = vpop.f32.mrf.mxu0
        %725 = vdwg.mxu0
        %v726 = vmul.f32 %v723, 0.35355338
        %v727 = vpack.c.bf16 %v726, %v726
        %v728 = vpack.c.bf16 %v723, %v723
        %v729 = vlaneseq
        %v730 = vshrl.u32 %v729, 7
        %v731 = vlaneseq
        %v732 = vand.u32 %v731, 127
        %vm733 = vcmp.gt.s32.totalorder %v732, %v730
        %v734 = vsel %vm733, -1e+30, 0.0
        %v736 = vunpack.c.l.b16 %v728
        %v737 = vpack.c.b16 %v736, %v736
        %738 = vrot.lane.b32.xlu0 %v737, 96
        %v739 = vpop.permute.xlu0 %738
        %vm740 = vcmask 64512
        %v742 = vsel %vm740, %v727, 0
        %v745 = vsel %vm740, %v739, 0
        %747 = vmatpush.bf16.xpose.msra.mxu0 0
        %748 = vmatpush.bf16.xpose.msra.mxu0 0
        %749 = vmatpush.bf16.xpose.msra.mxu0 0
        %750 = vmatpush.bf16.xpose.msra.mxu0 0
        %751 = vmatpush.bf16.xpose.msra.mxu0 0
        %752 = vmatpush.bf16.xpose.msra.mxu0 0
        %753 = vmatpush.bf16.xpose.msra.mxu0 0
        %754 = vmatpush.bf16.xpose.msra.mxu0 %v745
        %755 = vmatmul.bf16.gmra.mxu0 %v742
        %v756 = vpop.f32.mrf.mxu0
        %v757 = vadd.f32 %v734, %v756
        %v758 = vpop.f32.mrf.mxu0
        %759 = vdwg.mxu0
        %v760 = vsel %vm740, %v757, -inf
        %761 = vmax.xlane.f32.xlu0 %v760
        %v762 = vpop.xlane.xlu0 %761
        %v763 = vsub.f32 %v757, %v762
        %v764 = vmul.f32 %v763, 1.442695
        %v765 = vpow.pop %v764
        %v766 = vsel %vm740, %v765, 0.0
        %767 = vadd.xlane.f32.xlu0 %v766
        %v768 = vpop.xlane.xlu0 %767
        %v769 = vrcp.pop %v768
        %v770 = vmul.f32 %v765, %v769
        %v771 = vpack.c.bf16 %v770, %v770
        %772 = vrot.lane.b32.xlu0 %v737, 64
        %v773 = vpop.permute.xlu0 %772
        %v775 = vsel %vm740, %v771, 0
        %vm777 = vcmask 1043456
        %v779 = vsel %vm777, %v773, 0
        %781 = vmatpush.bf16.msra.mxu0 0
        %782 = vmatpush.bf16.msra.mxu0 0
        %783 = vmatpush.bf16.msra.mxu0 0
        %784 = vmatpush.bf16.msra.mxu0 0
        %785 = vmatpush.bf16.msra.mxu0 0
        %786 = vmatpush.bf16.msra.mxu0 0
        %787 = vmatpush.bf16.msra.mxu0 0
        %788 = vmatpush.bf16.msra.mxu0 %v779
        %789 = vmatmul.bf16.gmra.mxu0 %v775
        %v790 = vpop.f32.mrf.mxu0
        %v791 = vadd.f32 0.0, %v790
        %v792 = vpop.f32.mrf.mxu0
        %793 = vdwg.mxu0
        %v795 = vunpack.c.l.b16 %v727
        %v796 = vpack.c.b16 %v795, %v795
        %797 = vrot.lane.b32.xlu0 %v796, 120
        %v798 = vpop.permute.xlu0 %797
        %799 = vrot.lane.b32.xlu0 %v737, 88
        %v800 = vpop.permute.xlu0 %799
        %v802 = vsel %vm740, %v798, 0
        %v805 = vsel %vm740, %v800, 0
        %807 = vmatpush.bf16.xpose.msra.mxu0 0
        %808 = vmatpush.bf16.xpose.msra.mxu0 0
        %809 = vmatpush.bf16.xpose.msra.mxu0 0
        %810 = vmatpush.bf16.xpose.msra.mxu0 0
        %811 = vmatpush.bf16.xpose.msra.mxu0 0
        %812 = vmatpush.bf16.xpose.msra.mxu0 0
        %813 = vmatpush.bf16.xpose.msra.mxu0 0
        %814 = vmatpush.bf16.xpose.msra.mxu0 %v805
        %815 = vmatmul.bf16.gmra.mxu0 %v802
        %v816 = vpop.f32.mrf.mxu0
        %v817 = vadd.f32 %v734, %v816
        %v818 = vpop.f32.mrf.mxu0
        %819 = vdwg.mxu0
        %v820 = vsel %vm740, %v817, -inf
        %821 = vmax.xlane.f32.xlu0 %v820
        %v822 = vpop.xlane.xlu0 %821
        %v823 = vsub.f32 %v817, %v822
        %v824 = vmul.f32 %v823, 1.442695
        %v825 = vpow.pop %v824
        %v826 = vsel %vm740, %v825, 0.0
        %827 = vadd.xlane.f32.xlu0 %v826
        %v828 = vpop.xlane.xlu0 %827
        %v829 = vrcp.pop %v828
        %v830 = vmul.f32 %v825, %v829
        %v831 = vpack.c.bf16 %v830, %v830
        %832 = vrot.lane.b32.xlu0 %v737, 56
        %v833 = vpop.permute.xlu0 %832
        %v835 = vsel %vm740, %v831, 0
        %v838 = vsel %vm777, %v833, 0
        %840 = vmatpush.bf16.msra.mxu0 0
        %841 = vmatpush.bf16.msra.mxu0 0
        %842 = vmatpush.bf16.msra.mxu0 0
        %843 = vmatpush.bf16.msra.mxu0 0
        %844 = vmatpush.bf16.msra.mxu0 0
        %845 = vmatpush.bf16.msra.mxu0 0
        %846 = vmatpush.bf16.msra.mxu0 0
        %847 = vmatpush.bf16.msra.mxu0 %v838
        %848 = vmatmul.bf16.gmra.mxu0 %v835
        %v849 = vpop.f32.mrf.mxu0
        %v850 = vadd.f32 0.0, %v849
        %v851 = vpop.f32.mrf.mxu0
        %852 = vdwg.mxu0
        %853 = vrot.lane.b32.xlu0 %v796, 112
        %v854 = vpop.permute.xlu0 %853
        %855 = vrot.lane.b32.xlu0 %v737, 80
        %v856 = vpop.permute.xlu0 %855
        %v858 = vsel %vm740, %v854, 0
        %v861 = vsel %vm740, %v856, 0
        %863 = vmatpush.bf16.xpose.msra.mxu0 0
        %864 = vmatpush.bf16.xpose.msra.mxu0 0
        %865 = vmatpush.bf16.xpose.msra.mxu0 0
        %866 = vmatpush.bf16.xpose.msra.mxu0 0
        %867 = vmatpush.bf16.xpose.msra.mxu0 0
        %868 = vmatpush.bf16.xpose.msra.mxu0 0
        %869 = vmatpush.bf16.xpose.msra.mxu0 0
        %870 = vmatpush.bf16.xpose.msra.mxu0 %v861
        %871 = vmatmul.bf16.gmra.mxu0 %v858
        %v872 = vpop.f32.mrf.mxu0
        %v873 = vadd.f32 %v734, %v872
        %v874 = vpop.f32.mrf.mxu0
        %875 = vdwg.mxu0
        %v876 = vsel %vm740, %v873, -inf
        %877 = vmax.xlane.f32.xlu0 %v876
        %v878 = vpop.xlane.xlu0 %877
        %v879 = vsub.f32 %v873, %v878
        %v880 = vmul.f32 %v879, 1.442695
        %v881 = vpow.pop %v880
        %v882 = vsel %vm740, %v881, 0.0
        %883 = vadd.xlane.f32.xlu0 %v882
        %v884 = vpop.xlane.xlu0 %883
        %v885 = vrcp.pop %v884
        %v886 = vmul.f32 %v881, %v885
        %v887 = vpack.c.bf16 %v886, %v886
        %888 = vrot.lane.b32.xlu0 %v737, 48
        %v889 = vpop.permute.xlu0 %888
        %v891 = vsel %vm740, %v887, 0
        %v894 = vsel %vm777, %v889, 0
        %896 = vmatpush.bf16.msra.mxu0 0
        %897 = vmatpush.bf16.msra.mxu0 0
        %898 = vmatpush.bf16.msra.mxu0 0
        %899 = vmatpush.bf16.msra.mxu0 0
        %900 = vmatpush.bf16.msra.mxu0 0
        %901 = vmatpush.bf16.msra.mxu0 0
        %902 = vmatpush.bf16.msra.mxu0 0
        %903 = vmatpush.bf16.msra.mxu0 %v894
        %904 = vmatmul.bf16.gmra.mxu0 %v891
        %v905 = vpop.f32.mrf.mxu0
        %v906 = vadd.f32 0.0, %v905
        %v907 = vpop.f32.mrf.mxu0
        %908 = vdwg.mxu0
        %909 = vrot.lane.b32.xlu0 %v796, 104
        %v910 = vpop.permute.xlu0 %909
        %911 = vrot.lane.b32.xlu0 %v737, 72
        %v912 = vpop.permute.xlu0 %911
        %v914 = vsel %vm740, %v910, 0
        %v917 = vsel %vm740, %v912, 0
        %919 = vmatpush.bf16.xpose.msra.mxu0 0
        %920 = vmatpush.bf16.xpose.msra.mxu0 0
        %921 = vmatpush.bf16.xpose.msra.mxu0 0
        %922 = vmatpush.bf16.xpose.msra.mxu0 0
        %923 = vmatpush.bf16.xpose.msra.mxu0 0
        %924 = vmatpush.bf16.xpose.msra.mxu0 0
        %925 = vmatpush.bf16.xpose.msra.mxu0 0
        %926 = vmatpush.bf16.xpose.msra.mxu0 %v917
        %927 = vmatmul.bf16.gmra.mxu0 %v914
        %v928 = vpop.f32.mrf.mxu0
        %v929 = vadd.f32 %v734, %v928
        %v930 = vpop.f32.mrf.mxu0
        %931 = vdwg.mxu0
        %v932 = vsel %vm740, %v929, -inf
        %933 = vmax.xlane.f32.xlu0 %v932
        %v934 = vpop.xlane.xlu0 %933
        %v935 = vsub.f32 %v929, %v934
        %v936 = vmul.f32 %v935, 1.442695
        %v937 = vpow.pop %v936
        %v938 = vsel %vm740, %v937, 0.0
        %939 = vadd.xlane.f32.xlu0 %v938
        %v940 = vpop.xlane.xlu0 %939
        %v941 = vrcp.pop %v940
        %v942 = vmul.f32 %v937, %v941
        %v943 = vpack.c.bf16 %v942, %v942
        %944 = vrot.lane.b32.xlu0 %v737, 40
        %v945 = vpop.permute.xlu0 %944
        %v947 = vsel %vm740, %v943, 0
        %v950 = vsel %vm777, %v945, 0
        %952 = vmatpush.bf16.msra.mxu0 0
        %953 = vmatpush.bf16.msra.mxu0 0
        %954 = vmatpush.bf16.msra.mxu0 0
        %955 = vmatpush.bf16.msra.mxu0 0
        %956 = vmatpush.bf16.msra.mxu0 0
        %957 = vmatpush.bf16.msra.mxu0 0
        %958 = vmatpush.bf16.msra.mxu0 0
        %959 = vmatpush.bf16.msra.mxu0 %v950
        %960 = vmatmul.bf16.gmra.mxu0 %v947
        %v961 = vpop.f32.mrf.mxu0
        %v962 = vadd.f32 0.0, %v961
        %v963 = vpop.f32.mrf.mxu0
        %964 = vdwg.mxu0
        %966 = vrot.lane.b32.xlu0 %v850, 8
        %v967 = vpop.permute.xlu0 %966
        %970 = vrot.lane.b32.xlu0 %v906, 16
        %v971 = vpop.permute.xlu0 %970
        %974 = vrot.lane.b32.xlu0 %v962, 24
        %v975 = vpop.permute.xlu0 %974
        %v977 = vsel %vm740, %v791, %v967
        %vm978 = vcmask 130048
        %v979 = vsel %vm978, %v977, %v971
        %vm980 = vcmask 195584
        %v981 = vsel %vm980, %v979, %v975
        %v982 = vpack.c.bf16 %v981, %v981
        %v983 = vld [vmem:[%s614] sm:$0xf]
        %v984 = vld [vmem:[%s614 + $0x4] sm:$0xf]
        %v985 = vld [vmem:[%s614 + $0x8] sm:$0xf]
        %v986 = vld [vmem:[%s614 + $0xc] sm:$0xf]
        %v987 = vld [vmem:[%s617] sm:$0x1]
        %v989 = vperm.slane %v987, 0
        %v995 = vunpack.c.l.b16 %v983
        %v996 = vunpack.c.l.b16 %v984
        %v997 = vunpack.c.l.b16 %v985
        %v998 = vunpack.c.l.b16 %v986
        %v999 = vpack.c.b16 %v996, %v995
        %v1000 = vpack.c.b16 %v998, %v997
        %v1004 = vsel %vm651, %v982, 0
        %1006 = vmatpush.bf16.msra.mxu0 0
        %1007 = vmatpush.bf16.msra.mxu0 0
        %1008 = vmatpush.bf16.msra.mxu0 0
        %1009 = vmatpush.bf16.msra.mxu0 0
        %1010 = vmatpush.bf16.msra.mxu0 0
        %1011 = vmatpush.bf16.msra.mxu0 0
        %1012 = vmatpush.bf16.msra.mxu0 %v1000
        %1013 = vmatpush.bf16.msra.mxu0 %v999
        %1014 = vmatmul.bf16.gmra.mxu0 %v1004
        %v1015 = vpop.f32.mrf.mxu0
        %v1016 = vadd.f32 %v989, %v1015
        %v1017 = vpop.f32.mrf.mxu0
        %1018 = vdwg.mxu0
        %v1019 = vadd.f32 %v648, %v1016
        %v1020 = vld [vmem:[%s620] sm:$0x1]
        %v1021 = vld [vmem:[%s623] sm:$0x1]
        %v1022 = vsel %vm651, %v1019, 0.0
        %1023 = vadd.xlane.f32.xlu0 %v1022
        %v1024 = vpop.xlane.xlu0 %1023
        %v1025 = vmul.f32 %v1024, %v661
        %v1026 = vsub.f32 %v1019, %v1025
        %v1027 = vmul.f32 %v1026, %v1026
        %v1028 = vsel %vm651, %v1027, 0.0
        %1029 = vadd.xlane.f32.xlu0 %v1028
        %v1030 = vpop.xlane.xlu0 %1029
        %v1031 = vmul.f32 %v1030, %v661
        %v1032 = vadd.f32 %v1031, 1e-05
        %v1033 = vrsqrt.pop %v1032
        %v1034 = vmul.f32 %v1033, %v1032
        %v1035 = vmul.f32 %v1034, %v1033
        %v1036 = vmul.f32 0.5, %v1035
        %v1037 = vsub.f32 1.5, %v1036
        %v1038 = vmul.f32 %v1033, %v1037
        %vm1039 = vweird.f32 %v1032
        %vm1040 = vweird.f32 %v1033
        %vm1041 = vmor %vm1039, %vm1040
        %v1042 = vsel %vm1041, %v1033, %v1038
        %v1043 = vmul.f32 %v1026, %v1042
        %v1045 = vperm.slane %v1020, 0
        %v1047 = vmul.f32 %v1043, %v1045
        %v1049 = vperm.slane %v1021, 0
        %v1051 = vadd.f32 %v1047, %v1049
        %v1052 = vpack.c.bf16 %v1051, %v1051
        %v1053 = vld [vmem:[%s628] sm:$0xf]
        %v1054 = vld [vmem:[%s628 + $0x4] sm:$0xf]
        %v1055 = vld [vmem:[%s628 + $0x8] sm:$0xf]
        %v1056 = vld [vmem:[%s628 + $0xc] sm:$0xf]
        %v1057 = vld [vmem:[%s631] sm:$0x1]
        %v1059 = vperm.slane %v1057, 0
        %v1065 = vunpack.c.l.b16 %v1053
        %v1066 = vunpack.c.l.b16 %v1054
        %v1067 = vunpack.c.l.b16 %v1055
        %v1068 = vunpack.c.l.b16 %v1056
        %v1069 = vpack.c.b16 %v1066, %v1065
        %v1070 = vpack.c.b16 %v1068, %v1067
        %v1074 = vsel %vm651, %v1052, 0
        %1076 = vmatpush.bf16.msra.mxu0 0
        %1077 = vmatpush.bf16.msra.mxu0 0
        %1078 = vmatpush.bf16.msra.mxu0 0
        %1079 = vmatpush.bf16.msra.mxu0 0
        %1080 = vmatpush.bf16.msra.mxu0 0
        %1081 = vmatpush.bf16.msra.mxu0 0
        %1082 = vmatpush.bf16.msra.mxu0 %v1070
        %1083 = vmatpush.bf16.msra.mxu0 %v1069
        %1084 = vmatmul.bf16.gmra.mxu0 %v1074
        %v1085 = vpop.f32.mrf.mxu0
        %v1086 = vadd.f32 %v1059, %v1085
        %v1087 = vpop.f32.mrf.mxu0
        %1088 = vdwg.mxu0
        %v1089 = vmul.f32 %v1086, 0.5
        %v1090 = vmul.f32 %v1086, 0.044715
        %v1091 = vmul.f32 %v1090, %v1086
        %v1092 = vmul.f32 %v1091, %v1086
        %v1093 = vadd.f32 %v1086, %v1092
        %v1094 = vmul.f32 %v1093, 0.7978845
        %v1095 = vtanh.pop %v1094
        %v1096 = vadd.f32 %v1095, 1.0
        %v1097 = vmul.f32 %v1089, %v1096
        %v1098 = vpack.c.bf16 %v1097, %v1097
        %v1099 = vld [vmem:[%s636] sm:$0xf]
        %v1100 = vld [vmem:[%s636 + $0x4] sm:$0xf]
        %v1101 = vld [vmem:[%s636 + $0x8] sm:$0xf]
        %v1102 = vld [vmem:[%s636 + $0xc] sm:$0xf]
        %v1103 = vld [vmem:[%s636 + $0x10] sm:$0xf]
        %v1104 = vld [vmem:[%s636 + $0x14] sm:$0xf]
        %v1105 = vld [vmem:[%s636 + $0x18] sm:$0xf]
        %v1106 = vld [vmem:[%s636 + $0x1c] sm:$0xf]
        %v1107 = vld [vmem:[%s636 + $0x20] sm:$0xf]
        %v1108 = vld [vmem:[%s636 + $0x24] sm:$0xf]
        %v1109 = vld [vmem:[%s636 + $0x28] sm:$0xf]
        %v1110 = vld [vmem:[%s636 + $0x2c] sm:$0xf]
        %v1111 = vld [vmem:[%s636 + $0x30] sm:$0xf]
        %v1112 = vld [vmem:[%s636 + $0x34] sm:$0xf]
        %v1113 = vld [vmem:[%s636 + $0x38] sm:$0xf]
        %v1114 = vld [vmem:[%s636 + $0x3c] sm:$0xf]
        %v1115 = vld [vmem:[%s639] sm:$0x1]
        %v1117 = vperm.slane %v1115, 0
        %v1135 = vunpack.c.l.b16 %v1099
        %v1136 = vunpack.c.l.b16 %v1100
        %v1137 = vunpack.c.l.b16 %v1101
        %v1138 = vunpack.c.l.b16 %v1102
        %v1139 = vunpack.c.l.b16 %v1103
        %v1140 = vunpack.c.l.b16 %v1104
        %v1141 = vunpack.c.l.b16 %v1105
        %v1142 = vunpack.c.l.b16 %v1106
        %v1143 = vunpack.c.l.b16 %v1107
        %v1144 = vunpack.c.l.b16 %v1108
        %v1145 = vunpack.c.l.b16 %v1109
        %v1146 = vunpack.c.l.b16 %v1110
        %v1147 = vunpack.c.l.b16 %v1111
        %v1148 = vunpack.c.l.b16 %v1112
        %v1149 = vunpack.c.l.b16 %v1113
        %v1150 = vunpack.c.l.b16 %v1114
        %v1151 = vpack.c.b16 %v1136, %v1135
        %v1152 = vpack.c.b16 %v1138, %v1137
        %v1153 = vpack.c.b16 %v1140, %v1139
        %v1154 = vpack.c.b16 %v1142, %v1141
        %v1155 = vpack.c.b16 %v1144, %v1143
        %v1156 = vpack.c.b16 %v1146, %v1145
        %v1157 = vpack.c.b16 %v1148, %v1147
        %v1158 = vpack.c.b16 %v1150, %v1149
        %1167 = vmatpush.bf16.msra.mxu0 %v1158
        %1168 = vmatpush.bf16.msra.mxu0 %v1157
        %1169 = vmatpush.bf16.msra.mxu0 %v1156
        %1170 = vmatpush.bf16.msra.mxu0 %v1155
        %1171 = vmatpush.bf16.msra.mxu0 %v1154
        %1172 = vmatpush.bf16.msra.mxu0 %v1153
        %1173 = vmatpush.bf16.msra.mxu0 %v1152
        %1174 = vmatpush.bf16.msra.mxu0 %v1151
        %1175 = vmatmul.bf16.gmra.mxu0 %v1098
        %v1176 = vpop.f32.mrf.mxu0
        %v1177 = vadd.f32 %v1117, %v1176
        %v1178 = vpop.f32.mrf.mxu0
        %1179 = vdwg.mxu0
        %v1180 = vadd.f32 %v1019, %v1177
        %1181 = vst.msk [vmem:[%s591] sm:$0xff] %vm651, %v1180
        %s1182 = sand.u32 %s385, 1
        %s1183 = scalar_lea.sflag [#allocation3], %s1182
        %s1184 = sand.u32 %s385, 1
        %s1185 = smul.addr %s1184, 8
        %s1186 = scalar_lea.vmem [#allocation2], %s1185
        // Predicated region
        $region77: #{tpu_custom_call.1} parent=71 // pred_check
          %p1187 = pneg %p395
        $region78: #{tpu_custom_call.1} parent=71 // pred_check_branch
          %1189 = sbr.rel (%p1187) target = $region80
        $region79: #{tpu_custom_call.1} parent=71 // pred_region
          %1191 = vsyncadd %s1183, 0
          %s1192 = smul.addr %s31, 8
          %s1193 = scalar_lea.hbm %s13, %s1192
          %s1195 = sshll.u32 %s1186, 4
          %s1196 = int_to_ptr.vmem [resolvable:$true] %s1195
          %s1197 = sshll.u32 %s1193, 4
          %s1198 = int_to_ptr.hbm [resolvable:$true] %s1197
          %1200 = dma.vmem_to_hbm [thread:$0]  %s1196, 128, %s1198, %s1183
        $region80: #{tpu_custom_call.1} parent=71 // pred_fallthru
          _
      $region72: #{tpu_custom_call.1} parent=5 // pred_fallthru
        _
      %p1201 = scmp.le.s32.totalorder 2, %s22
      // Predicated region
      $region81: #{tpu_custom_call.1} parent=5 // pred_check
        %p1202 = pneg %p1201
      $region82: #{tpu_custom_call.1} parent=5 // pred_check_branch
        %1204 = sbr.rel (%p1202) target = $region84
      $region83: #{tpu_custom_call.1} parent=5 // pred_region
        %s1205 = ssub.s32 %s22, 2
        // Predicated region
        $region85: #{tpu_custom_call.1} parent=83 // pred_check
          %p1206 = pneg %p401
        $region86: #{tpu_custom_call.1} parent=83 // pred_check_branch
          %1208 = sbr.rel (%p1206) target = $region88
        $region87: #{tpu_custom_call.1} parent=83 // pred_region
          %s1209 = sand.u32 %s386, 1
          %s1210 = scalar_lea.sflag [#allocation3], %s1209
          %s1211 = sand.u32 %s386, 1
          %s1212 = smul.addr %s1211, 8
          %s1213 = scalar_lea.vmem [#allocation2], %s1212
          %1215 = dma.done %s1210, 128
        $region88: #{tpu_custom_call.1} parent=83 // pred_fallthru
          _
      $region84: #{tpu_custom_call.1} parent=5 // pred_fallthru
        _
    $region6: #{tpu_custom_call.1} parent=1 // loop_footer
      %s26 = sadd.s32 1, %s22
    $region7: #{tpu_custom_call.1} parent=1 // loop_footer_branch
      %21 = sbr.rel target = $region3
    $region8: #{tpu_custom_call.1} parent=1 // loop_exit
      _
    %1216 = vsyncpa [#allocation3], 1
    %s1217 = scalar_lea.sflag [#allocation3], 1
    %1218 = vsyncpa %s1217, 1

</llo_original>
